<compile_context>
chip_gen: v5e
topology: v5e:2x2
jax: 0.10.0
libtpu: 0.0.40
codegen_flags: <defaults>
</compile_context>

<pallas_src>
import functools

import jax
import jax.numpy as jnp
from jax import lax
from jax.experimental import pallas as pl
from jax.experimental.pallas import tpu as pltpu


# ---------------------------------------------------------------------------
# In-kernel helpers (traced inside the fused time kernel)
# ---------------------------------------------------------------------------

def _sigmoid(x):
    return 1.0 / (1.0 + jnp.exp(-x))


def _summarize_zs(x, p_row, k, fp):
    """zs = summarize(x, k).T, zero padded to (fp, fp).

    x     : (N, fp)  node features; lanes >= true feature dim are zero.
    p_row : (1, fp)  p / ||p||_2, lane-padded with zeros.
    Returns zs with zs[f, r] = x[idx_r, f] * y[idx_r] for r < k (else 0),
    where y = x @ p and idx_r is the r-th largest score (ties -> smaller idx).
    """
    n = x.shape[0]
    # Scores in both layouts (two tiny MXU ops, no transpose needed).
    y_col = lax.dot_general(x, p_row, (((1,), (1,)), ((), ())),
                            preferred_element_type=jnp.float32)        # (N, 1)
    y_row = lax.dot_general(p_row, x, (((1,), (1,)), ((), ())),
                            preferred_element_type=jnp.float32)        # (1, N)
    # rank[n] = #{m : y[m] > y[n]  or  (y[m] == y[n] and m < n)}
    i_row = lax.broadcasted_iota(jnp.int32, (n, n), 0)                 # n
    i_col = lax.broadcasted_iota(jnp.int32, (n, n), 1)                 # m
    beats = (y_row > y_col) | ((y_row == y_col) & (i_col < i_row))
    rank = jnp.sum(beats.astype(jnp.float32), axis=1, keepdims=True)   # (N, 1)
    # Scaled selection matrix in transposed layout: ssc_t[n, r] = y[n] if
    # rank[n] == r < k else 0.
    r_iota = lax.broadcasted_iota(jnp.int32, (n, fp), 1)
    sel = (r_iota.astype(jnp.float32) == rank) & (r_iota < k)
    ssc_t = jnp.where(sel, y_col, 0.0)                                 # (N, fp)
    # zs[f, r] = sum_n x[n, f] * ssc_t[n, r]   (A^T @ B, no explicit transpose)
    return lax.dot_general(x, ssc_t, (((0,), (0,)), ((), ())),
                           preferred_element_type=jnp.float32)         # (fp, fp)


def _gru_update(zs, w_ref, wzrh, uzr, uh, bzrh, fr):
    """EvolveGCN weight-evolution GRU on the (fr, fp) top slab of W."""
    h = w_ref[0:fr, :]                                                 # (fr, fp)
    wx = jnp.dot(wzrh, zs, preferred_element_type=jnp.float32)        # (3fr, fp)
    ux = jnp.dot(uzr, h, preferred_element_type=jnp.float32)          # (2fr, fp)
    z = _sigmoid(wx[0:fr] + ux[0:fr] + bzrh[0:fr])
    r = _sigmoid(wx[fr:2 * fr] + ux[fr:2 * fr] + bzrh[fr:2 * fr])
    ht = jnp.tanh(wx[2 * fr:3 * fr]
                  + jnp.dot(uh, r * h, preferred_element_type=jnp.float32)
                  + bzrh[2 * fr:3 * fr])
    # Rows >= fr of w_ref stay zero from the t == 0 init -> math unchanged.
    w_ref[0:fr, :] = (1.0 - z) * h + z * ht


def _gconv(a, h, w, relu):
    ah = jnp.dot(a, h, preferred_element_type=jnp.float32)
    hw = jnp.dot(ah, w, preferred_element_type=jnp.float32)
    return jnp.maximum(hw, 0.0) if relu else hw


# ---------------------------------------------------------------------------
# Fused time-loop kernel: grid=(T,), W / W2 and Y resident in VMEM
# ---------------------------------------------------------------------------

def _evolvegcn_fused_kernel(a_ref, x_ref, w0_ref, w20_ref,
                            p1_ref, wzrh1_ref, uzr1_ref, uh1_ref, bzrh1_ref,
                            p2_ref, wzrh2_ref, uzr2_ref, uh2_ref, bzrh2_ref,
                            src_ref, trg_ref, us_ref, ut_ref,
                            out_ref, w_ref, w2_ref,
                            y_scr,
                            *, fr, fp, k1, k2):
    t = pl.program_id(0)

    @pl.when(t == 0)
    def _():
        w_ref[...] = w0_ref[...]
        w2_ref[...] = w20_ref[...]

    a = a_ref[0]                                                       # (N, N)
    x = x_ref[0]                                                       # (N, fp)
    n = a.shape[0]

    # ---- layer 1: evolve W with the GRU, then graph-conv (ReLU)
    zs1 = _summarize_zs(x, p1_ref[...], k1, fp)
    _gru_update(zs1, w_ref, wzrh1_ref[...], uzr1_ref[...],
                uh1_ref[...], bzrh1_ref[...], fr)
    h1 = _gconv(a, x, w_ref[...], relu=True)                           # (N, fp)

    # ---- layer 2: evolve W2, then graph-conv (linear)
    zs2 = _summarize_zs(h1, p2_ref[...], k2, fp)
    _gru_update(zs2, w2_ref, wzrh2_ref[...], uzr2_ref[...],
                uh2_ref[...], bzrh2_ref[...], fr)
    y_t = _gconv(a, h1, w2_ref[...], relu=False)                       # (N, fp)

    row0 = pl.multiple_of(t * n, n)
    y_scr[pl.ds(row0, n), :] = y_t

    # ---- edge classifier head, fused into the last grid step ----
    @pl.when(t == pl.num_programs(0) - 1)
    def _():
        tn = y_scr.shape[0]
        e = src_ref.shape[0]
        yflat = y_scr[...]                                             # (T*N, fp)
        lane = lax.broadcasted_iota(jnp.int32, (e, tn), 1)
        src_oh = (lane == src_ref[...]).astype(jnp.float32)            # (E, T*N)
        trg_oh = (lane == trg_ref[...]).astype(jnp.float32)
        ysrc = jnp.dot(src_oh, yflat, preferred_element_type=jnp.float32)
        ytrg = jnp.dot(trg_oh, yflat, preferred_element_type=jnp.float32)
        out_ref[...] = (
            jnp.dot(ysrc, us_ref[...], preferred_element_type=jnp.float32)
            + jnp.dot(ytrg, ut_ref[...], preferred_element_type=jnp.float32))


# ---------------------------------------------------------------------------
# Host-side wrapper
# ---------------------------------------------------------------------------

def _round_up(x, m):
    return ((x + m - 1) // m) * m


def _pad2(x, rows, cols):
    x = jnp.asarray(x, jnp.float32)
    return jnp.pad(x, ((0, rows - x.shape[0]), (0, cols - x.shape[1])))


def evolvegcn_forward(A, X, edges, params):
    T, N, F0 = X.shape
    F1 = params["W_init"].shape[1]
    F2 = params["W_init2"].shape[1]
    F3 = params["U"].shape[1]
    FR = _round_up(max(F0, F1, F2), 8)          # sublane pad (GRU slabs)
    FP = _round_up(max(F0, F1, F2, F3), 128)    # lane pad (dense stores)

    f32 = jnp.float32
    Af = jnp.asarray(A, f32)
    Xp = jnp.pad(jnp.asarray(X, f32), ((0, 0), (0, 0), (0, FP - F0)))

    def prow(p):
        p = jnp.asarray(p, f32)
        p = p / jnp.linalg.norm(p)
        return jnp.pad(p.reshape(1, -1), ((0, 0), (0, FP - p.shape[0])))

    def stack_w(a, b, c):   # stacked [W_Z; W_R; W_H] or [B_Z; B_R; B_H]
        return jnp.concatenate([_pad2(a, FR, FP), _pad2(b, FR, FP),
                                _pad2(c, FR, FP)], axis=0)

    def stack_u(a, b):      # stacked [U_Z; U_R]
        return jnp.concatenate([_pad2(a, FR, FR), _pad2(b, FR, FR)], axis=0)

    p1 = prow(params["p"])
    wzrh1 = stack_w(params["W_Z"], params["W_R"], params["W_H"])
    uzr1 = stack_u(params["U_Z"], params["U_R"])
    uh1 = _pad2(params["U_H"], FR, FR)
    bzrh1 = stack_w(params["B_Z"], params["B_R"], params["B_H"])

    p2 = prow(params["p2"])
    wzrh2 = stack_w(params["W_Z2"], params["W_R2"], params["W_H2"])
    uzr2 = stack_u(params["U_Z2"], params["U_R2"])
    uh2 = _pad2(params["U_H2"], FR, FR)
    bzrh2 = stack_w(params["B_Z2"], params["B_R2"], params["B_H2"])

    w0 = _pad2(params["W_init"], FP, FP)
    w20 = _pad2(params["W_init2"], FP, FP)

    U = jnp.asarray(params["U"], f32)
    us = _pad2(U[:F2], FP, FP)      # src half of U  (concat-free edge head)
    ut = _pad2(U[F2:], FP, FP)      # trg half of U

    edges = jnp.asarray(edges, jnp.int32)
    src_idx = (edges[0] * N + edges[1]).reshape(-1, 1)   # time*N + src
    trg_idx = (edges[0] * N + edges[2]).reshape(-1, 1)   # time*N + trg
    E = src_idx.shape[0]

    const2 = lambda t: (0, 0)
    time3 = lambda t: (t, 0, 0)

    # Rough advisory cost for the XLA scheduler.
    flops = (T * (2 * (2 * N * N * FP + 2 * N * FP * FP)            # gconvs
                  + 2 * (2 * 3 * FR * FP * FP + 2 * N * FP * FP))   # GRU + summ
             + 2 * (2 * E * T * N * FP) + 2 * (2 * E * FP * FP))    # edge head
    transcendentals = T * 2 * 3 * FR * FP
    bytes_accessed = 4 * (Af.size + Xp.size + 4 * FP * FP
                          + 2 * (4 * FR * FP + 3 * FR * FR + FP)
                          + E * (FP + 2))

    out_pad, w_pad, w2_pad = pl.pallas_call(
        functools.partial(_evolvegcn_fused_kernel, fr=FR, fp=FP, k1=F1, k2=F2),
        grid=(T,),
        in_specs=[
            pl.BlockSpec((1, N, N), time3),         # A[t]
            pl.BlockSpec((1, N, FP), time3),        # X[t]
            pl.BlockSpec((FP, FP), const2),         # W_init
            pl.BlockSpec((FP, FP), const2),         # W_init2
            pl.BlockSpec((1, FP), const2),          # p / ||p||
            pl.BlockSpec((3 * FR, FP), const2),     # [W_Z;W_R;W_H]
            pl.BlockSpec((2 * FR, FR), const2),     # [U_Z;U_R]
            pl.BlockSpec((FR, FR), const2),         # U_H
            pl.BlockSpec((3 * FR, FP), const2),     # [B_Z;B_R;B_H]
            pl.BlockSpec((1, FP), const2),          # p2 / ||p2||
            pl.BlockSpec((3 * FR, FP), const2),
            pl.BlockSpec((2 * FR, FR), const2),
            pl.BlockSpec((FR, FR), const2),
            pl.BlockSpec((3 * FR, FP), const2),
            pl.BlockSpec((E, 1), const2),           # edge src row ids
            pl.BlockSpec((E, 1), const2),           # edge trg row ids
            pl.BlockSpec((FP, FP), const2),         # U[:F2] padded
            pl.BlockSpec((FP, FP), const2),         # U[F2:] padded
        ],
        out_specs=(
            pl.BlockSpec((E, FP), const2),          # edge-head output
            pl.BlockSpec((FP, FP), const2),         # W   (VMEM resident)
            pl.BlockSpec((FP, FP), const2),         # W2  (VMEM resident)
        ),
        out_shape=(
            jax.ShapeDtypeStruct((E, FP), f32),
            jax.ShapeDtypeStruct((FP, FP), f32),
            jax.ShapeDtypeStruct((FP, FP), f32),
        ),
        scratch_shapes=[pltpu.VMEM((T * N, FP), f32)],   # Y, VMEM resident
        compiler_params=pltpu.CompilerParams(
            dimension_semantics=("arbitrary",),          # sequential GRU state
            vmem_limit_bytes=64 * 1024 * 1024),
        cost_estimate=pl.CostEstimate(flops=flops,
                                      transcendentals=transcendentals,
                                      bytes_accessed=bytes_accessed),
    )(Af, Xp, w0, w20,
      p1, wzrh1, uzr1, uh1, bzrh1,
      p2, wzrh2, uzr2, uh2, bzrh2,
      src_idx, trg_idx, us, ut)

    output = out_pad[:, :F3]
    W = w_pad[:F0, :F1]
    W2 = w2_pad[:F1, :F2]
    return output, W, W2


# ---------------------------------------------------------------------------
# Deterministic parameter construction (mirrors the torch module's shapes)
# ---------------------------------------------------------------------------

def make_params(key, F):
    names_shapes = []
    i = 0
    names_shapes += [
        ("p", (F[i],)),
        ("W_Z", (F[i], F[i])), ("U_Z", (F[i], F[i])), ("B_Z", (F[i], F[i + 1])),
        ("W_R", (F[i], F[i])), ("U_R", (F[i], F[i])), ("B_R", (F[i], F[i + 1])),
        ("W_H", (F[i], F[i])), ("U_H", (F[i], F[i])), ("B_H", (F[i], F[i + 1])),
        ("W_init", (F[i], F[i + 1])),
    ]
    i = 1
    names_shapes += [
        ("p2", (F[i],)),
        ("W_Z2", (F[i], F[i])), ("U_Z2", (F[i], F[i])), ("B_Z2", (F[i], F[i + 1])),
        ("W_R2", (F[i], F[i])), ("U_R2", (F[i], F[i])), ("B_R2", (F[i], F[i + 1])),
        ("W_H2", (F[i], F[i])), ("U_H2", (F[i], F[i])), ("B_H2", (F[i], F[i + 1])),
        ("W_init2", (F[i], F[i + 1])),
    ]
    names_shapes += [("U", (F[-2] * 2, F[-1]))]

    params = {}
    keys = jax.random.split(key, len(names_shapes))
    for k, (name, shape) in zip(keys, names_shapes):
        params[name] = jax.random.normal(k, shape, dtype=jnp.float32)
    return params


if __name__ == "__main__":
    # Small deterministic problem: T time steps, N nodes, F0 input feats.
    T, N, F0 = 4, 16, 8
    hidden_feat = [8, 8, 8]
    F = [F0] + hidden_feat
    E = 32  # number of labelled edges

    root = jax.random.PRNGKey(0)
    k_x, k_a, k_es, k_et, k_tm, k_p = jax.random.split(root, 6)

    X = jax.random.normal(k_x, (T, N, F0), dtype=jnp.float32)
    # Dense stand-in for the per-time sparse adjacency matrices.
    A = (jax.random.uniform(k_a, (T, N, N)) < 0.3).astype(jnp.float32)

    edge_time = jax.random.randint(k_tm, (E,), 0, T)
    edge_src = jax.random.randint(k_es, (E,), 0, N)
    edge_trg = jax.random.randint(k_et, (E,), 0, N)
    edges = jnp.stack([edge_time, edge_src, edge_trg], axis=0).astype(jnp.int32)

    params = make_params(k_p, F)

    output, W, W2 = evolvegcn_forward(A, X, edges, params)
    jax.block_until_ready((output, W, W2))

    assert output.shape == (E, F[-1])
    assert W.shape == (F[0], F[1])
    assert W2.shape == (F[1], F[2])
    assert bool(jnp.all(jnp.isfinite(output)))
    assert bool(jnp.all(jnp.isfinite(W)))
    assert bool(jnp.all(jnp.isfinite(W2)))
    print("KERNEL_OK")
</pallas_src>

<mosaic_0001>
module attributes {stable_mosaic.version = 11 : i64} {
  func.func @_evolvegcn_fused_kernel(%arg0: i32, %arg1: memref<1x16x16xf32, #tpu.memory_space<vmem>>, %arg2: memref<1x16x128xf32, #tpu.memory_space<vmem>>, %arg3: memref<128x128xf32, #tpu.memory_space<vmem>>, %arg4: memref<128x128xf32, #tpu.memory_space<vmem>>, %arg5: memref<1x128xf32, #tpu.memory_space<vmem>>, %arg6: memref<24x128xf32, #tpu.memory_space<vmem>>, %arg7: memref<16x8xf32, #tpu.memory_space<vmem>>, %arg8: memref<8x8xf32, #tpu.memory_space<vmem>>, %arg9: memref<24x128xf32, #tpu.memory_space<vmem>>, %arg10: memref<1x128xf32, #tpu.memory_space<vmem>>, %arg11: memref<24x128xf32, #tpu.memory_space<vmem>>, %arg12: memref<16x8xf32, #tpu.memory_space<vmem>>, %arg13: memref<8x8xf32, #tpu.memory_space<vmem>>, %arg14: memref<24x128xf32, #tpu.memory_space<vmem>>, %arg15: memref<32x1xi32, #tpu.memory_space<vmem>>, %arg16: memref<32x1xi32, #tpu.memory_space<vmem>>, %arg17: memref<128x128xf32, #tpu.memory_space<vmem>>, %arg18: memref<128x128xf32, #tpu.memory_space<vmem>>, %arg19: memref<32x128xf32, #tpu.memory_space<vmem>>, %arg20: memref<128x128xf32, #tpu.memory_space<vmem>>, %arg21: memref<128x128xf32, #tpu.memory_space<vmem>>, %arg22: memref<64x128xf32, #tpu.memory_space<vmem>>) attributes {dimension_semantics = [#tpu.dimension_semantics<arbitrary>], iteration_bounds = array<i64: 4>, scalar_prefetch = 0 : i64, scratch_operands = 1 : i64, tpu.core_type = #tpu.core_type<tc>, window_params = [{transform_indices = @transform_0, window_bounds = array<i64: 1, 16, 16>}, {transform_indices = @transform_1, window_bounds = array<i64: 1, 16, 128>}, {pipeline_mode = #tpu.pipeline_mode<synchronous>, transform_indices = @transform_2, window_bounds = array<i64: 128, 128>}, {pipeline_mode = #tpu.pipeline_mode<synchronous>, transform_indices = @transform_3, window_bounds = array<i64: 128, 128>}, {pipeline_mode = #tpu.pipeline_mode<synchronous>, transform_indices = @transform_4, window_bounds = array<i64: 1, 128>}, {pipeline_mode = #tpu.pipeline_mode<synchronous>, transform_indices = @transform_5, window_bounds = array<i64: 24, 128>}, {pipeline_mode = #tpu.pipeline_mode<synchronous>, transform_indices = @transform_6, window_bounds = array<i64: 16, 8>}, {pipeline_mode = #tpu.pipeline_mode<synchronous>, transform_indices = @transform_7, window_bounds = array<i64: 8, 8>}, {pipeline_mode = #tpu.pipeline_mode<synchronous>, transform_indices = @transform_8, window_bounds = array<i64: 24, 128>}, {pipeline_mode = #tpu.pipeline_mode<synchronous>, transform_indices = @transform_9, window_bounds = array<i64: 1, 128>}, {pipeline_mode = #tpu.pipeline_mode<synchronous>, transform_indices = @transform_10, window_bounds = array<i64: 24, 128>}, {pipeline_mode = #tpu.pipeline_mode<synchronous>, transform_indices = @transform_11, window_bounds = array<i64: 16, 8>}, {pipeline_mode = #tpu.pipeline_mode<synchronous>, transform_indices = @transform_12, window_bounds = array<i64: 8, 8>}, {pipeline_mode = #tpu.pipeline_mode<synchronous>, transform_indices = @transform_13, window_bounds = array<i64: 24, 128>}, {pipeline_mode = #tpu.pipeline_mode<synchronous>, transform_indices = @transform_14, window_bounds = array<i64: 32, 1>}, {pipeline_mode = #tpu.pipeline_mode<synchronous>, transform_indices = @transform_15, window_bounds = array<i64: 32, 1>}, {pipeline_mode = #tpu.pipeline_mode<synchronous>, transform_indices = @transform_16, window_bounds = array<i64: 128, 128>}, {pipeline_mode = #tpu.pipeline_mode<synchronous>, transform_indices = @transform_17, window_bounds = array<i64: 128, 128>}, {pipeline_mode = #tpu.pipeline_mode<synchronous>, transform_indices = @transform_18, window_bounds = array<i64: 32, 128>}, {pipeline_mode = #tpu.pipeline_mode<synchronous>, transform_indices = @transform_19, window_bounds = array<i64: 128, 128>}, {pipeline_mode = #tpu.pipeline_mode<synchronous>, transform_indices = @transform_20, window_bounds = array<i64: 128, 128>}]} {
    %c0_i32 = arith.constant 0 : i32
    %0 = arith.cmpi eq, %arg0, %c0_i32 : i32
    %1 = arith.extui %0 : i1 to i32
    %c0_i32_0 = arith.constant 0 : i32
    %2 = arith.cmpi ne, %1, %c0_i32_0 : i32
    scf.if %2 {
      %c0_75 = arith.constant 0 : index
      %c0_76 = arith.constant 0 : index
      %170 = vector.load %arg3[%c0_75, %c0_76] : memref<128x128xf32, #tpu.memory_space<vmem>>, vector<128x128xf32>
      %c0_77 = arith.constant 0 : index
      %c0_78 = arith.constant 0 : index
      %171 = vector.load %arg20[%c0_77, %c0_78] : memref<128x128xf32, #tpu.memory_space<vmem>>, vector<128x128xf32>
      tpu.vector_store %arg20[%c0_77, %c0_78], %170 {strides = array<i32>} : memref<128x128xf32, #tpu.memory_space<vmem>>, vector<128x128xf32>,
      %c0_79 = arith.constant 0 : index
      %c0_80 = arith.constant 0 : index
      %172 = vector.load %arg4[%c0_79, %c0_80] : memref<128x128xf32, #tpu.memory_space<vmem>>, vector<128x128xf32>
      %c0_81 = arith.constant 0 : index
      %c0_82 = arith.constant 0 : index
      %173 = vector.load %arg21[%c0_81, %c0_82] : memref<128x128xf32, #tpu.memory_space<vmem>>, vector<128x128xf32>
      tpu.vector_store %arg21[%c0_81, %c0_82], %172 {strides = array<i32>} : memref<128x128xf32, #tpu.memory_space<vmem>>, vector<128x128xf32>,
    } else {
    }
    %c0 = arith.constant 0 : index
    %c0_1 = arith.constant 0 : index
    %c0_2 = arith.constant 0 : index
    %3 = vector.load %arg1[%c0, %c0_1, %c0_2] : memref<1x16x16xf32, #tpu.memory_space<vmem>>, vector<1x16x16xf32>
    %4 = vector.shape_cast %3 : vector<1x16x16xf32> to vector<16x16xf32>
    %c0_3 = arith.constant 0 : index
    %c0_4 = arith.constant 0 : index
    %c0_5 = arith.constant 0 : index
    %5 = vector.load %arg2[%c0_3, %c0_4, %c0_5] : memref<1x16x128xf32, #tpu.memory_space<vmem>>, vector<1x16x128xf32>
    %6 = vector.shape_cast %5 : vector<1x16x128xf32> to vector<16x128xf32>
    %c0_6 = arith.constant 0 : index
    %c0_7 = arith.constant 0 : index
    %7 = vector.load %arg5[%c0_6, %c0_7] : memref<1x128xf32, #tpu.memory_space<vmem>>, vector<1x128xf32>
    %cst = arith.constant dense<0.000000e+00> : vector<16x1xf32>
    %8 = tpu.matmul %6, %7, %cst {dimension_numbers = #tpu.dot_dimension_numbers<[1], [1], [0], [0], [0, 0, 1, 0], [], []>} : vector<16x128xf32>, vector<1x128xf32>, vector<16x1xf32> -> vector<16x1xf32>
    %cst_8 = arith.constant dense<0.000000e+00> : vector<1x16xf32>
    %9 = tpu.matmul %7, %6, %cst_8 {dimension_numbers = #tpu.dot_dimension_numbers<[1], [1], [0], [0], [0, 0, 1, 0], [], []>} : vector<1x128xf32>, vector<16x128xf32>, vector<1x16xf32> -> vector<1x16xf32>
    %10 = tpu.iota {dimensions = array<i32: 0>} : vector<16x16xi32>
    %11 = tpu.iota {dimensions = array<i32: 1>} : vector<16x16xi32>
    %12 = vector.broadcast %9 : vector<1x16xf32> to vector<16x16xf32>
    %13 = vector.broadcast %8 : vector<16x1xf32> to vector<16x16xf32>
    %14 = arith.cmpf ogt, %12, %13 : vector<16x16xf32>
    %15 = vector.broadcast %9 : vector<1x16xf32> to vector<16x16xf32>
    %16 = vector.broadcast %8 : vector<16x1xf32> to vector<16x16xf32>
    %17 = arith.cmpf oeq, %15, %16 : vector<16x16xf32>
    %18 = arith.cmpi slt, %11, %10 : vector<16x16xi32>
    %19 = arith.andi %17, %18 : vector<16x16xi1>
    %20 = arith.ori %14, %19 : vector<16x16xi1>
    %21 = arith.extui %20 : vector<16x16xi1> to vector<16x16xi32>
    %22 = arith.sitofp %21 : vector<16x16xi32> to vector<16x16xf32>
    %cst_9 = arith.constant dense<0.000000e+00> : vector<16xf32>
    %23 = vector.multi_reduction <add>, %22, %cst_9 [1] : vector<16x16xf32> to vector<16xf32>
    %24 = vector.shape_cast %23 : vector<16xf32> to vector<16x1xf32>
    %25 = tpu.iota {dimensions = array<i32: 1>} : vector<16x128xi32>
    %26 = arith.sitofp %25 : vector<16x128xi32> to vector<16x128xf32>
    %27 = vector.broadcast %24 : vector<16x1xf32> to vector<16x128xf32>
    %28 = arith.cmpf oeq, %26, %27 : vector<16x128xf32>
    %c8_i32 = arith.constant 8 : i32
    %29 = vector.broadcast %c8_i32 : i32 to vector<16x128xi32>
    %30 = arith.cmpi slt, %25, %29 : vector<16x128xi32>
    %31 = arith.andi %28, %30 : vector<16x128xi1>
    %cst_10 = arith.constant 0.000000e+00 : f32
    %32 = vector.shape_cast %8 : vector<16x1xf32> to vector<16x1xf32>
    %33 = vector.broadcast %32 : vector<16x1xf32> to vector<16x128xf32>
    %34 = vector.broadcast %cst_10 : f32 to vector<16x128xf32>
    %35 = arith.select %31, %33, %34 : vector<16x128xi1>, vector<16x128xf32>
    %cst_11 = arith.constant dense<0.000000e+00> : vector<128x128xf32>
    %36 = tpu.matmul %6, %35, %cst_11 {dimension_numbers = #tpu.dot_dimension_numbers<[0], [0], [1], [1], [0, 1, 1, 1], [], []>} : vector<16x128xf32>, vector<16x128xf32>, vector<128x128xf32> -> vector<128x128xf32>
    %c0_12 = arith.constant 0 : index
    %c0_13 = arith.constant 0 : index
    %37 = vector.load %arg6[%c0_12, %c0_13] : memref<24x128xf32, #tpu.memory_space<vmem>>, vector<24x128xf32>
    %c0_14 = arith.constant 0 : index
    %c0_15 = arith.constant 0 : index
    %38 = vector.load %arg7[%c0_14, %c0_15] : memref<16x8xf32, #tpu.memory_space<vmem>>, vector<16x8xf32>
    %c0_16 = arith.constant 0 : index
    %c0_17 = arith.constant 0 : index
    %39 = vector.load %arg8[%c0_16, %c0_17] : memref<8x8xf32, #tpu.memory_space<vmem>>, vector<8x8xf32>
    %c0_18 = arith.constant 0 : index
    %c0_19 = arith.constant 0 : index
    %40 = vector.load %arg9[%c0_18, %c0_19] : memref<24x128xf32, #tpu.memory_space<vmem>>, vector<24x128xf32>
    %c0_20 = arith.constant 0 : index
    %c0_21 = arith.constant 0 : index
    %41 = vector.load %arg20[%c0_20, %c0_21] : memref<128x128xf32, #tpu.memory_space<vmem>>, vector<8x128xf32>
    %cst_22 = arith.constant dense<0.000000e+00> : vector<24x128xf32>
    %42 = tpu.matmul %37, %36, %cst_22 {dimension_numbers = #tpu.dot_dimension_numbers<[1], [0], [0], [1], [0, 0, 1, 1], [], []>} : vector<24x128xf32>, vector<128x128xf32>, vector<24x128xf32> -> vector<24x128xf32>
    %cst_23 = arith.constant dense<0.000000e+00> : vector<16x128xf32>
    %43 = tpu.matmul %38, %41, %cst_23 {dimension_numbers = #tpu.dot_dimension_numbers<[1], [0], [0], [1], [0, 0, 1, 1], [], []>} : vector<16x8xf32>, vector<8x128xf32>, vector<16x128xf32> -> vector<16x128xf32>
    %44 = vector.extract_strided_slice %42 {offsets = [0, 0], sizes = [8, 128], strides = [1, 1]} : vector<24x128xf32> to vector<8x128xf32>
    %45 = vector.extract_strided_slice %43 {offsets = [0, 0], sizes = [8, 128], strides = [1, 1]} : vector<16x128xf32> to vector<8x128xf32>
    %46 = arith.addf %44, %45 : vector<8x128xf32>
    %47 = vector.extract_strided_slice %40 {offsets = [0, 0], sizes = [8, 128], strides = [1, 1]} : vector<24x128xf32> to vector<8x128xf32>
    %48 = arith.addf %46, %47 : vector<8x128xf32>
    %cst_24 = arith.constant 0.000000e+00 : f32
    %49 = vector.broadcast %cst_24 : f32 to vector<8x128xf32>
    %50 = arith.subf %49, %48 : vector<8x128xf32>
    %51 = math.exp %50 : vector<8x128xf32>
    %cst_25 = arith.constant 1.000000e+00 : f32
    %52 = vector.broadcast %cst_25 : f32 to vector<8x128xf32>
    %53 = arith.addf %52, %51 : vector<8x128xf32>
    %cst_26 = arith.constant 1.000000e+00 : f32
    %54 = vector.broadcast %cst_26 : f32 to vector<8x128xf32>
    %55 = arith.divf %54, %53 : vector<8x128xf32>
    %56 = vector.extract_strided_slice %42 {offsets = [8, 0], sizes = [8, 128], strides = [1, 1]} : vector<24x128xf32> to vector<8x128xf32>
    %57 = vector.extract_strided_slice %43 {offsets = [8, 0], sizes = [8, 128], strides = [1, 1]} : vector<16x128xf32> to vector<8x128xf32>
    %58 = arith.addf %56, %57 : vector<8x128xf32>
    %59 = vector.extract_strided_slice %40 {offsets = [8, 0], sizes = [8, 128], strides = [1, 1]} : vector<24x128xf32> to vector<8x128xf32>
    %60 = arith.addf %58, %59 : vector<8x128xf32>
    %cst_27 = arith.constant 0.000000e+00 : f32
    %61 = vector.broadcast %cst_27 : f32 to vector<8x128xf32>
    %62 = arith.subf %61, %60 : vector<8x128xf32>
    %63 = math.exp %62 : vector<8x128xf32>
    %cst_28 = arith.constant 1.000000e+00 : f32
    %64 = vector.broadcast %cst_28 : f32 to vector<8x128xf32>
    %65 = arith.addf %64, %63 : vector<8x128xf32>
    %cst_29 = arith.constant 1.000000e+00 : f32
    %66 = vector.broadcast %cst_29 : f32 to vector<8x128xf32>
    %67 = arith.divf %66, %65 : vector<8x128xf32>
    %68 = vector.extract_strided_slice %42 {offsets = [16, 0], sizes = [8, 128], strides = [1, 1]} : vector<24x128xf32> to vector<8x128xf32>
    %69 = arith.mulf %67, %41 : vector<8x128xf32>
    %cst_30 = arith.constant dense<0.000000e+00> : vector<8x128xf32>
    %70 = tpu.matmul %39, %69, %cst_30 {dimension_numbers = #tpu.dot_dimension_numbers<[1], [0], [0], [1], [0, 0, 1, 1], [], []>} : vector<8x8xf32>, vector<8x128xf32>, vector<8x128xf32> -> vector<8x128xf32>
    %71 = arith.addf %68, %70 : vector<8x128xf32>
    %72 = vector.extract_strided_slice %40 {offsets = [16, 0], sizes = [8, 128], strides = [1, 1]} : vector<24x128xf32> to vector<8x128xf32>
    %73 = arith.addf %71, %72 : vector<8x128xf32>
    %74 = math.tanh %73 : vector<8x128xf32>
    %cst_31 = arith.constant 1.000000e+00 : f32
    %75 = vector.broadcast %cst_31 : f32 to vector<8x128xf32>
    %76 = arith.subf %75, %55 : vector<8x128xf32>
    %77 = arith.mulf %76, %41 : vector<8x128xf32>
    %78 = arith.mulf %55, %74 : vector<8x128xf32>
    %79 = arith.addf %77, %78 : vector<8x128xf32>
    %c0_32 = arith.constant 0 : index
    %c0_33 = arith.constant 0 : index
    %80 = vector.load %arg20[%c0_32, %c0_33] : memref<128x128xf32, #tpu.memory_space<vmem>>, vector<8x128xf32>
    tpu.vector_store %arg20[%c0_32, %c0_33], %79 {strides = array<i32>} : memref<128x128xf32, #tpu.memory_space<vmem>>, vector<8x128xf32>,
    %c0_34 = arith.constant 0 : index
    %c0_35 = arith.constant 0 : index
    %81 = vector.load %arg20[%c0_34, %c0_35] : memref<128x128xf32, #tpu.memory_space<vmem>>, vector<128x128xf32>
    %cst_36 = arith.constant dense<0.000000e+00> : vector<16x128xf32>
    %82 = tpu.matmul %4, %6, %cst_36 {dimension_numbers = #tpu.dot_dimension_numbers<[1], [0], [0], [1], [0, 0, 1, 1], [], []>} : vector<16x16xf32>, vector<16x128xf32>, vector<16x128xf32> -> vector<16x128xf32>
    %cst_37 = arith.constant dense<0.000000e+00> : vector<16x128xf32>
    %83 = tpu.matmul %82, %81, %cst_37 {dimension_numbers = #tpu.dot_dimension_numbers<[1], [0], [0], [1], [0, 0, 1, 1], [], []>} : vector<16x128xf32>, vector<128x128xf32>, vector<16x128xf32> -> vector<16x128xf32>
    %cst_38 = arith.constant 0.000000e+00 : f32
    %84 = vector.broadcast %cst_38 : f32 to vector<16x128xf32>
    %85 = arith.maximumf %83, %84 : vector<16x128xf32>
    %c0_39 = arith.constant 0 : index
    %c0_40 = arith.constant 0 : index
    %86 = vector.load %arg10[%c0_39, %c0_40] : memref<1x128xf32, #tpu.memory_space<vmem>>, vector<1x128xf32>
    %cst_41 = arith.constant dense<0.000000e+00> : vector<16x1xf32>
    %87 = tpu.matmul %85, %86, %cst_41 {dimension_numbers = #tpu.dot_dimension_numbers<[1], [1], [0], [0], [0, 0, 1, 0], [], []>} : vector<16x128xf32>, vector<1x128xf32>, vector<16x1xf32> -> vector<16x1xf32>
    %cst_42 = arith.constant dense<0.000000e+00> : vector<1x16xf32>
    %88 = tpu.matmul %86, %85, %cst_42 {dimension_numbers = #tpu.dot_dimension_numbers<[1], [1], [0], [0], [0, 0, 1, 0], [], []>} : vector<1x128xf32>, vector<16x128xf32>, vector<1x16xf32> -> vector<1x16xf32>
    %89 = tpu.iota {dimensions = array<i32: 0>} : vector<16x16xi32>
    %90 = tpu.iota {dimensions = array<i32: 1>} : vector<16x16xi32>
    %91 = vector.broadcast %88 : vector<1x16xf32> to vector<16x16xf32>
    %92 = vector.broadcast %87 : vector<16x1xf32> to vector<16x16xf32>
    %93 = arith.cmpf ogt, %91, %92 : vector<16x16xf32>
    %94 = vector.broadcast %88 : vector<1x16xf32> to vector<16x16xf32>
    %95 = vector.broadcast %87 : vector<16x1xf32> to vector<16x16xf32>
    %96 = arith.cmpf oeq, %94, %95 : vector<16x16xf32>
    %97 = arith.cmpi slt, %90, %89 : vector<16x16xi32>
    %98 = arith.andi %96, %97 : vector<16x16xi1>
    %99 = arith.ori %93, %98 : vector<16x16xi1>
    %100 = arith.extui %99 : vector<16x16xi1> to vector<16x16xi32>
    %101 = arith.sitofp %100 : vector<16x16xi32> to vector<16x16xf32>
    %cst_43 = arith.constant dense<0.000000e+00> : vector<16xf32>
    %102 = vector.multi_reduction <add>, %101, %cst_43 [1] : vector<16x16xf32> to vector<16xf32>
    %103 = vector.shape_cast %102 : vector<16xf32> to vector<16x1xf32>
    %104 = tpu.iota {dimensions = array<i32: 1>} : vector<16x128xi32>
    %105 = arith.sitofp %104 : vector<16x128xi32> to vector<16x128xf32>
    %106 = vector.broadcast %103 : vector<16x1xf32> to vector<16x128xf32>
    %107 = arith.cmpf oeq, %105, %106 : vector<16x128xf32>
    %c8_i32_44 = arith.constant 8 : i32
    %108 = vector.broadcast %c8_i32_44 : i32 to vector<16x128xi32>
    %109 = arith.cmpi slt, %104, %108 : vector<16x128xi32>
    %110 = arith.andi %107, %109 : vector<16x128xi1>
    %cst_45 = arith.constant 0.000000e+00 : f32
    %111 = vector.shape_cast %87 : vector<16x1xf32> to vector<16x1xf32>
    %112 = vector.broadcast %111 : vector<16x1xf32> to vector<16x128xf32>
    %113 = vector.broadcast %cst_45 : f32 to vector<16x128xf32>
    %114 = arith.select %110, %112, %113 : vector<16x128xi1>, vector<16x128xf32>
    %cst_46 = arith.constant dense<0.000000e+00> : vector<128x128xf32>
    %115 = tpu.matmul %85, %114, %cst_46 {dimension_numbers = #tpu.dot_dimension_numbers<[0], [0], [1], [1], [0, 1, 1, 1], [], []>} : vector<16x128xf32>, vector<16x128xf32>, vector<128x128xf32> -> vector<128x128xf32>
    %c0_47 = arith.constant 0 : index
    %c0_48 = arith.constant 0 : index
    %116 = vector.load %arg11[%c0_47, %c0_48] : memref<24x128xf32, #tpu.memory_space<vmem>>, vector<24x128xf32>
    %c0_49 = arith.constant 0 : index
    %c0_50 = arith.constant 0 : index
    %117 = vector.load %arg12[%c0_49, %c0_50] : memref<16x8xf32, #tpu.memory_space<vmem>>, vector<16x8xf32>
    %c0_51 = arith.constant 0 : index
    %c0_52 = arith.constant 0 : index
    %118 = vector.load %arg13[%c0_51, %c0_52] : memref<8x8xf32, #tpu.memory_space<vmem>>, vector<8x8xf32>
    %c0_53 = arith.constant 0 : index
    %c0_54 = arith.constant 0 : index
    %119 = vector.load %arg14[%c0_53, %c0_54] : memref<24x128xf32, #tpu.memory_space<vmem>>, vector<24x128xf32>
    %c0_55 = arith.constant 0 : index
    %c0_56 = arith.constant 0 : index
    %120 = vector.load %arg21[%c0_55, %c0_56] : memref<128x128xf32, #tpu.memory_space<vmem>>, vector<8x128xf32>
    %cst_57 = arith.constant dense<0.000000e+00> : vector<24x128xf32>
    %121 = tpu.matmul %116, %115, %cst_57 {dimension_numbers = #tpu.dot_dimension_numbers<[1], [0], [0], [1], [0, 0, 1, 1], [], []>} : vector<24x128xf32>, vector<128x128xf32>, vector<24x128xf32> -> vector<24x128xf32>
    %cst_58 = arith.constant dense<0.000000e+00> : vector<16x128xf32>
    %122 = tpu.matmul %117, %120, %cst_58 {dimension_numbers = #tpu.dot_dimension_numbers<[1], [0], [0], [1], [0, 0, 1, 1], [], []>} : vector<16x8xf32>, vector<8x128xf32>, vector<16x128xf32> -> vector<16x128xf32>
    %123 = vector.extract_strided_slice %121 {offsets = [0, 0], sizes = [8, 128], strides = [1, 1]} : vector<24x128xf32> to vector<8x128xf32>
    %124 = vector.extract_strided_slice %122 {offsets = [0, 0], sizes = [8, 128], strides = [1, 1]} : vector<16x128xf32> to vector<8x128xf32>
    %125 = arith.addf %123, %124 : vector<8x128xf32>
    %126 = vector.extract_strided_slice %119 {offsets = [0, 0], sizes = [8, 128], strides = [1, 1]} : vector<24x128xf32> to vector<8x128xf32>
    %127 = arith.addf %125, %126 : vector<8x128xf32>
    %cst_59 = arith.constant 0.000000e+00 : f32
    %128 = vector.broadcast %cst_59 : f32 to vector<8x128xf32>
    %129 = arith.subf %128, %127 : vector<8x128xf32>
    %130 = math.exp %129 : vector<8x128xf32>
    %cst_60 = arith.constant 1.000000e+00 : f32
    %131 = vector.broadcast %cst_60 : f32 to vector<8x128xf32>
    %132 = arith.addf %131, %130 : vector<8x128xf32>
    %cst_61 = arith.constant 1.000000e+00 : f32
    %133 = vector.broadcast %cst_61 : f32 to vector<8x128xf32>
    %134 = arith.divf %133, %132 : vector<8x128xf32>
    %135 = vector.extract_strided_slice %121 {offsets = [8, 0], sizes = [8, 128], strides = [1, 1]} : vector<24x128xf32> to vector<8x128xf32>
    %136 = vector.extract_strided_slice %122 {offsets = [8, 0], sizes = [8, 128], strides = [1, 1]} : vector<16x128xf32> to vector<8x128xf32>
    %137 = arith.addf %135, %136 : vector<8x128xf32>
    %138 = vector.extract_strided_slice %119 {offsets = [8, 0], sizes = [8, 128], strides = [1, 1]} : vector<24x128xf32> to vector<8x128xf32>
    %139 = arith.addf %137, %138 : vector<8x128xf32>
    %cst_62 = arith.constant 0.000000e+00 : f32
    %140 = vector.broadcast %cst_62 : f32 to vector<8x128xf32>
    %141 = arith.subf %140, %139 : vector<8x128xf32>
    %142 = math.exp %141 : vector<8x128xf32>
    %cst_63 = arith.constant 1.000000e+00 : f32
    %143 = vector.broadcast %cst_63 : f32 to vector<8x128xf32>
    %144 = arith.addf %143, %142 : vector<8x128xf32>
    %cst_64 = arith.constant 1.000000e+00 : f32
    %145 = vector.broadcast %cst_64 : f32 to vector<8x128xf32>
    %146 = arith.divf %145, %144 : vector<8x128xf32>
    %147 = vector.extract_strided_slice %121 {offsets = [16, 0], sizes = [8, 128], strides = [1, 1]} : vector<24x128xf32> to vector<8x128xf32>
    %148 = arith.mulf %146, %120 : vector<8x128xf32>
    %cst_65 = arith.constant dense<0.000000e+00> : vector<8x128xf32>
    %149 = tpu.matmul %118, %148, %cst_65 {dimension_numbers = #tpu.dot_dimension_numbers<[1], [0], [0], [1], [0, 0, 1, 1], [], []>} : vector<8x8xf32>, vector<8x128xf32>, vector<8x128xf32> -> vector<8x128xf32>
    %150 = arith.addf %147, %149 : vector<8x128xf32>
    %151 = vector.extract_strided_slice %119 {offsets = [16, 0], sizes = [8, 128], strides = [1, 1]} : vector<24x128xf32> to vector<8x128xf32>
    %152 = arith.addf %150, %151 : vector<8x128xf32>
    %153 = math.tanh %152 : vector<8x128xf32>
    %cst_66 = arith.constant 1.000000e+00 : f32
    %154 = vector.broadcast %cst_66 : f32 to vector<8x128xf32>
    %155 = arith.subf %154, %134 : vector<8x128xf32>
    %156 = arith.mulf %155, %120 : vector<8x128xf32>
    %157 = arith.mulf %134, %153 : vector<8x128xf32>
    %158 = arith.addf %156, %157 : vector<8x128xf32>
    %c0_67 = arith.constant 0 : index
    %c0_68 = arith.constant 0 : index
    %159 = vector.load %arg21[%c0_67, %c0_68] : memref<128x128xf32, #tpu.memory_space<vmem>>, vector<8x128xf32>
    tpu.vector_store %arg21[%c0_67, %c0_68], %158 {strides = array<i32>} : memref<128x128xf32, #tpu.memory_space<vmem>>, vector<8x128xf32>,
    %c0_69 = arith.constant 0 : index
    %c0_70 = arith.constant 0 : index
    %160 = vector.load %arg21[%c0_69, %c0_70] : memref<128x128xf32, #tpu.memory_space<vmem>>, vector<128x128xf32>
    %cst_71 = arith.constant dense<0.000000e+00> : vector<16x128xf32>
    %161 = tpu.matmul %4, %85, %cst_71 {dimension_numbers = #tpu.dot_dimension_numbers<[1], [0], [0], [1], [0, 0, 1, 1], [], []>} : vector<16x16xf32>, vector<16x128xf32>, vector<16x128xf32> -> vector<16x128xf32>
    %cst_72 = arith.constant dense<0.000000e+00> : vector<16x128xf32>
    %162 = tpu.matmul %161, %160, %cst_72 {dimension_numbers = #tpu.dot_dimension_numbers<[1], [0], [0], [1], [0, 0, 1, 1], [], []>} : vector<16x128xf32>, vector<128x128xf32>, vector<16x128xf32> -> vector<16x128xf32>
    %c16_i32 = arith.constant 16 : i32
    %163 = arith.muli %arg0, %c16_i32 : i32
    %164 = tpu.assume_multiple %163, 16 : i32
    %165 = arith.index_cast %164 : i32 to index
    %c0_73 = arith.constant 0 : index
    %166 = vector.load %arg22[%165, %c0_73] : memref<64x128xf32, #tpu.memory_space<vmem>>, vector<16x128xf32>
    tpu.vector_store %arg22[%165, %c0_73], %162 {strides = array<i32>} : memref<64x128xf32, #tpu.memory_space<vmem>>, vector<16x128xf32>,
    %c3_i32 = arith.constant 3 : i32
    %167 = arith.cmpi eq, %arg0, %c3_i32 : i32
    %168 = arith.extui %167 : i1 to i32
    %c0_i32_74 = arith.constant 0 : i32
    %169 = arith.cmpi ne, %168, %c0_i32_74 : i32
    scf.if %169 {
      %c0_75 = arith.constant 0 : index
      %c0_76 = arith.constant 0 : index
      %170 = vector.load %arg22[%c0_75, %c0_76] : memref<64x128xf32, #tpu.memory_space<vmem>>, vector<64x128xf32>
      %171 = tpu.iota {dimensions = array<i32: 1>} : vector<32x64xi32>
      %c0_77 = arith.constant 0 : index
      %c0_78 = arith.constant 0 : index
      %172 = vector.load %arg15[%c0_77, %c0_78] : memref<32x1xi32, #tpu.memory_space<vmem>>, vector<32x1xi32>
      %173 = vector.broadcast %172 : vector<32x1xi32> to vector<32x64xi32>
      %174 = arith.cmpi eq, %171, %173 : vector<32x64xi32>
      %175 = arith.extui %174 : vector<32x64xi1> to vector<32x64xi32>
      %176 = arith.sitofp %175 : vector<32x64xi32> to vector<32x64xf32>
      %c0_79 = arith.constant 0 : index
      %c0_80 = arith.constant 0 : index
      %177 = vector.load %arg16[%c0_79, %c0_80] : memref<32x1xi32, #tpu.memory_space<vmem>>, vector<32x1xi32>
      %178 = vector.broadcast %177 : vector<32x1xi32> to vector<32x64xi32>
      %179 = arith.cmpi eq, %171, %178 : vector<32x64xi32>
      %180 = arith.extui %179 : vector<32x64xi1> to vector<32x64xi32>
      %181 = arith.sitofp %180 : vector<32x64xi32> to vector<32x64xf32>
      %cst_81 = arith.constant dense<0.000000e+00> : vector<32x128xf32>
      %182 = tpu.matmul %176, %170, %cst_81 {dimension_numbers = #tpu.dot_dimension_numbers<[1], [0], [0], [1], [0, 0, 1, 1], [], []>} : vector<32x64xf32>, vector<64x128xf32>, vector<32x128xf32> -> vector<32x128xf32>
      %cst_82 = arith.constant dense<0.000000e+00> : vector<32x128xf32>
      %183 = tpu.matmul %181, %170, %cst_82 {dimension_numbers = #tpu.dot_dimension_numbers<[1], [0], [0], [1], [0, 0, 1, 1], [], []>} : vector<32x64xf32>, vector<64x128xf32>, vector<32x128xf32> -> vector<32x128xf32>
      %c0_83 = arith.constant 0 : index
      %c0_84 = arith.constant 0 : index
      %184 = vector.load %arg17[%c0_83, %c0_84] : memref<128x128xf32, #tpu.memory_space<vmem>>, vector<128x128xf32>
      %cst_85 = arith.constant dense<0.000000e+00> : vector<32x128xf32>
      %185 = tpu.matmul %182, %184, %cst_85 {dimension_numbers = #tpu.dot_dimension_numbers<[1], [0], [0], [1], [0, 0, 1, 1], [], []>} : vector<32x128xf32>, vector<128x128xf32>, vector<32x128xf32> -> vector<32x128xf32>
      %c0_86 = arith.constant 0 : index
      %c0_87 = arith.constant 0 : index
      %186 = vector.load %arg18[%c0_86, %c0_87] : memref<128x128xf32, #tpu.memory_space<vmem>>, vector<128x128xf32>
      %cst_88 = arith.constant dense<0.000000e+00> : vector<32x128xf32>
      %187 = tpu.matmul %183, %186, %cst_88 {dimension_numbers = #tpu.dot_dimension_numbers<[1], [0], [0], [1], [0, 0, 1, 1], [], []>} : vector<32x128xf32>, vector<128x128xf32>, vector<32x128xf32> -> vector<32x128xf32>
      %188 = arith.addf %185, %187 : vector<32x128xf32>
      %c0_89 = arith.constant 0 : index
      %c0_90 = arith.constant 0 : index
      %189 = vector.load %arg19[%c0_89, %c0_90] : memref<32x128xf32, #tpu.memory_space<vmem>>, vector<32x128xf32>
      tpu.vector_store %arg19[%c0_89, %c0_90], %188 {strides = array<i32>} : memref<32x128xf32, #tpu.memory_space<vmem>>, vector<32x128xf32>,
    } else {
    }
    return
  }
  func.func @transform_0(%arg0: i32) -> (i32, i32, i32) {
    %c0_i32 = arith.constant 0 : i32
    %c0_i32_0 = arith.constant 0 : i32
    %c0_i32_1 = arith.constant 0 : i32
    return %arg0, %c0_i32, %c0_i32_0 : i32, i32, i32
  }
  func.func @transform_1(%arg0: i32) -> (i32, i32, i32) {
    %c0_i32 = arith.constant 0 : i32
    %c0_i32_0 = arith.constant 0 : i32
    %c0_i32_1 = arith.constant 0 : i32
    return %arg0, %c0_i32, %c0_i32_0 : i32, i32, i32
  }
  func.func @transform_2(%arg0: i32) -> (i32, i32) {
    %c0_i32 = arith.constant 0 : i32
    %c0_i32_0 = arith.constant 0 : i32
    %c0_i32_1 = arith.constant 0 : i32
    return %c0_i32, %c0_i32_0 : i32, i32
  }
  func.func @transform_3(%arg0: i32) -> (i32, i32) {
    %c0_i32 = arith.constant 0 : i32
    %c0_i32_0 = arith.constant 0 : i32
    %c0_i32_1 = arith.constant 0 : i32
    return %c0_i32, %c0_i32_0 : i32, i32
  }
  func.func @transform_4(%arg0: i32) -> (i32, i32) {
    %c0_i32 = arith.constant 0 : i32
    %c0_i32_0 = arith.constant 0 : i32
    %c0_i32_1 = arith.constant 0 : i32
    return %c0_i32, %c0_i32_0 : i32, i32
  }
  func.func @transform_5(%arg0: i32) -> (i32, i32) {
    %c0_i32 = arith.constant 0 : i32
    %c0_i32_0 = arith.constant 0 : i32
    %c0_i32_1 = arith.constant 0 : i32
    return %c0_i32, %c0_i32_0 : i32, i32
  }
  func.func @transform_6(%arg0: i32) -> (i32, i32) {
    %c0_i32 = arith.constant 0 : i32
    %c0_i32_0 = arith.constant 0 : i32
    %c0_i32_1 = arith.constant 0 : i32
    return %c0_i32, %c0_i32_0 : i32, i32
  }
  func.func @transform_7(%arg0: i32) -> (i32, i32) {
    %c0_i32 = arith.constant 0 : i32
    %c0_i32_0 = arith.constant 0 : i32
    %c0_i32_1 = arith.constant 0 : i32
    return %c0_i32, %c0_i32_0 : i32, i32
  }
  func.func @transform_8(%arg0: i32) -> (i32, i32) {
    %c0_i32 = arith.constant 0 : i32
    %c0_i32_0 = arith.constant 0 : i32
    %c0_i32_1 = arith.constant 0 : i32
    return %c0_i32, %c0_i32_0 : i32, i32
  }
  func.func @transform_9(%arg0: i32) -> (i32, i32) {
    %c0_i32 = arith.constant 0 : i32
    %c0_i32_0 = arith.constant 0 : i32
    %c0_i32_1 = arith.constant 0 : i32
    return %c0_i32, %c0_i32_0 : i32, i32
  }
  func.func @transform_10(%arg0: i32) -> (i32, i32) {
    %c0_i32 = arith.constant 0 : i32
    %c0_i32_0 = arith.constant 0 : i32
    %c0_i32_1 = arith.constant 0 : i32
    return %c0_i32, %c0_i32_0 : i32, i32
  }
  func.func @transform_11(%arg0: i32) -> (i32, i32) {
    %c0_i32 = arith.constant 0 : i32
    %c0_i32_0 = arith.constant 0 : i32
    %c0_i32_1 = arith.constant 0 : i32
    return %c0_i32, %c0_i32_0 : i32, i32
  }
  func.func @transform_12(%arg0: i32) -> (i32, i32) {
    %c0_i32 = arith.constant 0 : i32
    %c0_i32_0 = arith.constant 0 : i32
    %c0_i32_1 = arith.constant 0 : i32
    return %c0_i32, %c0_i32_0 : i32, i32
  }
  func.func @transform_13(%arg0: i32) -> (i32, i32) {
    %c0_i32 = arith.constant 0 : i32
    %c0_i32_0 = arith.constant 0 : i32
    %c0_i32_1 = arith.constant 0 : i32
    return %c0_i32, %c0_i32_0 : i32, i32
  }
  func.func @transform_14(%arg0: i32) -> (i32, i32) {
    %c0_i32 = arith.constant 0 : i32
    %c0_i32_0 = arith.constant 0 : i32
    %c0_i32_1 = arith.constant 0 : i32
    return %c0_i32, %c0_i32_0 : i32, i32
  }
  func.func @transform_15(%arg0: i32) -> (i32, i32) {
    %c0_i32 = arith.constant 0 : i32
    %c0_i32_0 = arith.constant 0 : i32
    %c0_i32_1 = arith.constant 0 : i32
    return %c0_i32, %c0_i32_0 : i32, i32
  }
  func.func @transform_16(%arg0: i32) -> (i32, i32) {
    %c0_i32 = arith.constant 0 : i32
    %c0_i32_0 = arith.constant 0 : i32
    %c0_i32_1 = arith.constant 0 : i32
    return %c0_i32, %c0_i32_0 : i32, i32
  }
  func.func @transform_17(%arg0: i32) -> (i32, i32) {
    %c0_i32 = arith.constant 0 : i32
    %c0_i32_0 = arith.constant 0 : i32
    %c0_i32_1 = arith.constant 0 : i32
    return %c0_i32, %c0_i32_0 : i32, i32
  }
  func.func @transform_18(%arg0: i32) -> (i32, i32) {
    %c0_i32 = arith.constant 0 : i32
    %c0_i32_0 = arith.constant 0 : i32
    %c0_i32_1 = arith.constant 0 : i32
    return %c0_i32, %c0_i32_0 : i32, i32
  }
  func.func @transform_19(%arg0: i32) -> (i32, i32) {
    %c0_i32 = arith.constant 0 : i32
    %c0_i32_0 = arith.constant 0 : i32
    %c0_i32_1 = arith.constant 0 : i32
    return %c0_i32, %c0_i32_0 : i32, i32
  }
  func.func @transform_20(%arg0: i32) -> (i32, i32) {
    %c0_i32 = arith.constant 0 : i32
    %c0_i32_0 = arith.constant 0 : i32
    %c0_i32_1 = arith.constant 0 : i32
    return %c0_i32, %c0_i32_0 : i32, i32
  }
}

</mosaic_0001>

<llo_original>
// kernel: tpu_custom_call.1
$region0: #{tpu_custom_call.1}
  #allocation0 [shape = 'u32[]', space=smem, size = 0x4, offset = 0x4, fixed_abs, tag = 'smem constant byte address 0x4 - core index']
  #allocation1 [shape = 'u32[72,128]{1,0:T(1,128)}', space=vmem, size = 0x9000, scoped, tag = 'internal scratch']
  #allocation2 [shape = 'f32[64,128]{1,0:T(8,128)}', space=vmem, size = 0x8000, scoped, tag = 'scratch operand']
  %s0 = inlined_call_operand.hbm [shape: f32[4,16,16], index: 0, kind: input, shape index: {}]
  %s1 = inlined_call_operand.hbm [shape: f32[4,16,128], index: 1, kind: input, shape index: {}]
  %s2 = inlined_call_operand.hbm [shape: f32[128,128], index: 2, kind: input, shape index: {}]
  %s3 = inlined_call_operand.hbm [shape: f32[128,128], index: 3, kind: input, shape index: {}]
  %s4 = inlined_call_operand.vmem [shape: f32[1,128], index: 4, kind: input, shape index: {}]
  %s5 = inlined_call_operand.hbm [shape: f32[24,128], index: 5, kind: input, shape index: {}]
  %s6 = inlined_call_operand.vmem [shape: f32[16,8], index: 6, kind: input, shape index: {}]
  %s7 = inlined_call_operand.hbm [shape: f32[8,8], index: 7, kind: input, shape index: {}]
  %s8 = inlined_call_operand.hbm [shape: f32[24,128], index: 8, kind: input, shape index: {}]
  %s9 = inlined_call_operand.hbm [shape: f32[1,128], index: 9, kind: input, shape index: {}]
  %s10 = inlined_call_operand.hbm [shape: f32[24,128], index: 10, kind: input, shape index: {}]
  %s11 = inlined_call_operand.vmem [shape: f32[16,8], index: 11, kind: input, shape index: {}]
  %s12 = inlined_call_operand.hbm [shape: f32[8,8], index: 12, kind: input, shape index: {}]
  %s13 = inlined_call_operand.hbm [shape: f32[24,128], index: 13, kind: input, shape index: {}]
  %s14 = inlined_call_operand.vmem [shape: s32[32,1], index: 14, kind: input, shape index: {}]
  %s15 = inlined_call_operand.vmem [shape: s32[32,1], index: 15, kind: input, shape index: {}]
  %s16 = inlined_call_operand.vmem [shape: f32[128,128], index: 16, kind: input, shape index: {}]
  %s17 = inlined_call_operand.hbm [shape: f32[128,128], index: 17, kind: input, shape index: {}]
  %s18 = inlined_call_operand.hbm [shape: f32[32,128], index: 18, kind: output, shape index: {0}]
  %s19 = inlined_call_operand.hbm [shape: f32[128,128], index: 19, kind: output, shape index: {1}]
  %s20 = inlined_call_operand.hbm [shape: f32[128,128], index: 20, kind: output, shape index: {2}]
  %21 = xla_tuple %s18, %s19, %s20
  %s22 = sld [smem:[#allocation0]]
  $region177: #{tpu_custom_call.1} parent=0
    _
  %s24 = ssub.s32 1, %s22
  %s25 = scalar_select 0, %s24, %s22
  $region1: #{tpu_custom_call.1} parent=0
    #allocation3 [shape = 'u8[16384]{0}', space=vmem, size = 0x4000, scoped, tag = 'input window, operand 0']
    #allocation4 [shape = 's32[2]{0}', space=sflag, size = 0x8, scoped, tag = 'scoped memory for tpu_custom_call.1']
    #allocation5 [shape = 's32[2]{0}', space=sflag, size = 0x8, scoped, tag = 'scoped memory for tpu_custom_call.1']
    #allocation6 [shape = 'u8[16384]{0}', space=vmem, size = 0x4000, scoped, tag = 'input window, operand 1']
    #allocation7 [shape = 's32[2]{0}', space=sflag, size = 0x8, scoped, tag = 'scoped memory for tpu_custom_call.1']
    #allocation8 [shape = 'u8[65536]{0}', space=vmem, size = 0x10000, scoped, tag = 'input window, operand 2, single buffered']
    #allocation9 [shape = 'u8[65536]{0}', space=vmem, size = 0x10000, scoped, tag = 'input window, operand 3, single buffered']
    #allocation10 [shape = 's32[1]{0}', space=sflag, size = 0x4, scoped, tag = 'scoped memory for tpu_custom_call.1']
    #allocation11 [shape = 'u8[12288]{0}', space=vmem, size = 0x3000, scoped, tag = 'input window, operand 5, single buffered']
    #allocation12 [shape = 'u8[4096]{0}', space=vmem, size = 0x1000, scoped, tag = 'input window, operand 7, single buffered']
    #allocation13 [shape = 's32[1]{0}', space=sflag, size = 0x4, scoped, tag = 'scoped memory for tpu_custom_call.1']
    #allocation14 [shape = 'u8[12288]{0}', space=vmem, size = 0x3000, scoped, tag = 'input window, operand 8, single buffered']
    #allocation15 [shape = 'u8[512]{0}', space=vmem, size = 0x400, scoped, tag = 'input window, operand 9, single buffered']
    #allocation16 [shape = 's32[1]{0}', space=sflag, size = 0x4, scoped, tag = 'scoped memory for tpu_custom_call.1']
    #allocation17 [shape = 'u8[12288]{0}', space=vmem, size = 0x3000, scoped, tag = 'input window, operand 10, single buffered']
    #allocation18 [shape = 'u8[4096]{0}', space=vmem, size = 0x1000, scoped, tag = 'input window, operand 12, single buffered']
    #allocation19 [shape = 's32[1]{0}', space=sflag, size = 0x4, scoped, tag = 'scoped memory for tpu_custom_call.1']
    #allocation20 [shape = 'u8[12288]{0}', space=vmem, size = 0x3000, scoped, tag = 'input window, operand 13, single buffered']
    #allocation21 [shape = 'u8[65536]{0}', space=vmem, size = 0x10000, scoped, tag = 'input window, operand 17, single buffered']
    #allocation22 [shape = 's32[1]{0}', space=sflag, size = 0x4, scoped, tag = 'scoped memory for tpu_custom_call.1']
    #allocation23 [shape = 'u8[16384]{0}', space=vmem, size = 0x4000, scoped, tag = 'output window, operand 0, single buffered']
    #allocation24 [shape = 'u8[65536]{0}', space=vmem, size = 0x10000, scoped, tag = 'output window, operand 1, single buffered']
    #allocation25 [shape = 's32[1]{0}', space=sflag, size = 0x4, scoped, tag = 'scoped memory for tpu_custom_call.1']
    #allocation26 [shape = 'u8[65536]{0}', space=vmem, size = 0x10000, scoped, tag = 'output window, operand 2, single buffered']
    %26 = vsyncpa [#allocation4], 0
    %s27 = scalar_lea.sflag [#allocation4], 1
    %28 = vsyncpa %s27, 0
    %29 = vsyncpa [#allocation7], 0
    %s30 = scalar_lea.sflag [#allocation7], 1
    %31 = vsyncpa %s30, 0
    %32 = vsyncpa [#allocation10], 0
    %33 = vsyncpa [#allocation13], 0
    %34 = vsyncpa [#allocation16], 0
    %35 = vsyncpa [#allocation19], 0
    %36 = vsyncpa [#allocation22], 0
    %37 = vsyncpa [#allocation5], 0
    %38 = vsyncpa [#allocation25], 0
    loop: start=0, step=1, limit=6
    $region2: #{tpu_custom_call.1} parent=1 // loop_pre_header
      _
    $region3: #{tpu_custom_call.1} parent=1 // loop_header
      %s40 = sphi 0, %s44
      %p41 = scmp.ge.s32.totalorder %s40, 6
      %s50 = sphi 0, %s52
      %s53 = sphi 0, %s50
      %s54 = sphi 0, %s53
      %s70 = sphi 0, %s54
      %s76 = sphi 0, %s78
      %s79 = sphi 0, %s76
      %s80 = sphi 0, %s79
      %s96 = sphi 0, %s80
      %s100 = sphi 0, %s100
      %s102 = sphi 0, %s100
      %s103 = sphi 0, %s102
      %s117 = sphi 0, %s103
      %s121 = sphi 0, %s121
      %s123 = sphi 0, %s121
      %s124 = sphi 0, %s123
      %s138 = sphi 0, %s124
      %s142 = sphi 0, %s142
      %s144 = sphi 0, %s142
      %s145 = sphi 0, %s144
      %s159 = sphi 0, %s145
      %s163 = sphi 0, %s163
      %s165 = sphi 0, %s163
      %s166 = sphi 0, %s165
      %s180 = sphi 0, %s166
      %s184 = sphi 0, %s184
      %s186 = sphi 0, %s184
      %s187 = sphi 0, %s186
      %s201 = sphi 0, %s187
      %s205 = sphi 0, %s205
      %s207 = sphi 0, %s205
      %s208 = sphi 0, %s207
      %s222 = sphi 0, %s208
      %s226 = sphi 0, %s226
      %s228 = sphi 0, %s226
      %s229 = sphi 0, %s228
      %s243 = sphi 0, %s229
      %s247 = sphi 0, %s247
      %s249 = sphi 0, %s247
      %s250 = sphi 0, %s249
      %s264 = sphi 0, %s250
      %s268 = sphi 0, %s268
      %s270 = sphi 0, %s268
      %s271 = sphi 0, %s270
      %s285 = sphi 0, %s271
      %s289 = sphi 0, %s289
      %s291 = sphi 0, %s289
      %s292 = sphi 0, %s291
      %s306 = sphi 0, %s292
      %s310 = sphi 0, %s310
      %s312 = sphi 0, %s310
      %s313 = sphi 0, %s312
      %s327 = sphi 0, %s313
      %s331 = sphi 0, %s331
      %s333 = sphi 0, %s331
      %s334 = sphi 0, %s333
      %s348 = sphi 0, %s334
      %s352 = sphi 0, %s352
      %s354 = sphi 0, %s352
      %s355 = sphi 0, %s354
      %s369 = sphi 0, %s355
      %s373 = sphi 0, %s373
      %s375 = sphi 0, %s373
      %s376 = sphi 0, %s375
      %s390 = sphi 0, %s376
      %s394 = sphi 0, %s394
      %s396 = sphi 0, %s394
      %s397 = sphi 0, %s396
      %s411 = sphi 0, %s397
      %s415 = sphi 0, %s415
      %s417 = sphi 0, %s415
      %s418 = sphi 0, %s417
      %s432 = sphi 0, %s418
      %s436 = sphi 0, %s436
      %s438 = sphi 0, %s436
      %s439 = sphi 0, %s438
      %s453 = sphi 0, %s439
      %s457 = sphi 0, %s457
      %s459 = sphi 0, %s457
      %s460 = sphi 0, %s459
      %s474 = sphi 0, %s460
      %s478 = sphi 0, %s478
      %s480 = sphi 0, %s478
      %s481 = sphi 0, %s480
      %s495 = sphi 0, %s481
    $region4: #{tpu_custom_call.1} parent=1 // loop_header_branch
      %43 = sbr.rel (%p41) target = $region8
    $region5: #{tpu_custom_call.1} parent=1 // loop_body
      %s45 = ssub.s32 %s40, 1
      %s46 = ssub.s32 %s40, 2
      %s47 = sadd.s32 %s40, 1
      %s48 = ssub.s32 %s40, %s47
      %p49 = scmp.eq.s32.totalorder %s48, 0
      %s51 = sadd.s32 %s50, 1
      %s52 = scalar_select %p49, %s50, %s51
      %p55 = pneg %p49
      %p56 = scmp.eq.s32.totalorder %s40, 3
      %p57 = por %p55, %p56
      %p58 = scmp.ne.s32.totalorder %s50, %s53
      %p59 = scmp.eq.s32.totalorder %s40, 0
      %p60 = por %p58, %p59
      %p61 = scmp.ne.s32.totalorder %s50, %s53
      %p62 = scmp.eq.s32.totalorder %s45, 3
      %p63 = por %p61, %p62
      %p64 = scmp.ne.s32.totalorder %s53, %s54
      %p65 = scmp.eq.s32.totalorder %s45, 0
      %p66 = por %p64, %p65
      %p67 = scmp.ne.s32.totalorder %s53, %s54
      %p68 = scmp.eq.s32.totalorder %s46, 3
      %p69 = por %p67, %p68
      %p71 = scmp.ne.s32.totalorder %s54, %s70
      %p72 = scmp.eq.s32.totalorder %s46, 0
      %p73 = por %p71, %p72
      %s74 = ssub.s32 %s40, %s47
      %p75 = scmp.eq.s32.totalorder %s74, 0
      %s77 = sadd.s32 %s76, 1
      %s78 = scalar_select %p75, %s76, %s77
      %p81 = pneg %p75
      %p82 = scmp.eq.s32.totalorder %s40, 3
      %p83 = por %p81, %p82
      %p84 = scmp.ne.s32.totalorder %s76, %s79
      %p85 = scmp.eq.s32.totalorder %s40, 0
      %p86 = por %p84, %p85
      %p87 = scmp.ne.s32.totalorder %s76, %s79
      %p88 = scmp.eq.s32.totalorder %s45, 3
      %p89 = por %p87, %p88
      %p90 = scmp.ne.s32.totalorder %s79, %s80
      %p91 = scmp.eq.s32.totalorder %s45, 0
      %p92 = por %p90, %p91
      %p93 = scmp.ne.s32.totalorder %s79, %s80
      %p94 = scmp.eq.s32.totalorder %s46, 3
      %p95 = por %p93, %p94
      %p97 = scmp.ne.s32.totalorder %s80, %s96
      %p98 = scmp.eq.s32.totalorder %s46, 0
      %p99 = por %p97, %p98
      %s101 = sadd.s32 %s100, 1
      %p104 = scmp.eq.s32.totalorder %s40, 3
      %p105 = scmp.ne.s32.totalorder %s100, %s102
      %p106 = scmp.eq.s32.totalorder %s40, 0
      %p107 = por %p105, %p106
      %p108 = scmp.ne.s32.totalorder %s100, %s102
      %p109 = scmp.eq.s32.totalorder %s45, 3
      %p110 = por %p108, %p109
      %p111 = scmp.ne.s32.totalorder %s102, %s103
      %p112 = scmp.eq.s32.totalorder %s45, 0
      %p113 = por %p111, %p112
      %p114 = scmp.ne.s32.totalorder %s102, %s103
      %p115 = scmp.eq.s32.totalorder %s46, 3
      %p116 = por %p114, %p115
      %p118 = scmp.ne.s32.totalorder %s103, %s117
      %p119 = scmp.eq.s32.totalorder %s46, 0
      %p120 = por %p118, %p119
      %s122 = sadd.s32 %s121, 1
      %p125 = scmp.eq.s32.totalorder %s40, 3
      %p126 = scmp.ne.s32.totalorder %s121, %s123
      %p127 = scmp.eq.s32.totalorder %s40, 0
      %p128 = por %p126, %p127
      %p129 = scmp.ne.s32.totalorder %s121, %s123
      %p130 = scmp.eq.s32.totalorder %s45, 3
      %p131 = por %p129, %p130
      %p132 = scmp.ne.s32.totalorder %s123, %s124
      %p133 = scmp.eq.s32.totalorder %s45, 0
      %p134 = por %p132, %p133
      %p135 = scmp.ne.s32.totalorder %s123, %s124
      %p136 = scmp.eq.s32.totalorder %s46, 3
      %p137 = por %p135, %p136
      %p139 = scmp.ne.s32.totalorder %s124, %s138
      %p140 = scmp.eq.s32.totalorder %s46, 0
      %p141 = por %p139, %p140
      %s143 = sadd.s32 %s142, 1
      %p146 = scmp.eq.s32.totalorder %s40, 3
      %p147 = scmp.ne.s32.totalorder %s142, %s144
      %p148 = scmp.eq.s32.totalorder %s40, 0
      %p149 = por %p147, %p148
      %p150 = scmp.ne.s32.totalorder %s142, %s144
      %p151 = scmp.eq.s32.totalorder %s45, 3
      %p152 = por %p150, %p151
      %p153 = scmp.ne.s32.totalorder %s144, %s145
      %p154 = scmp.eq.s32.totalorder %s45, 0
      %p155 = por %p153, %p154
      %p156 = scmp.ne.s32.totalorder %s144, %s145
      %p157 = scmp.eq.s32.totalorder %s46, 3
      %p158 = por %p156, %p157
      %p160 = scmp.ne.s32.totalorder %s145, %s159
      %p161 = scmp.eq.s32.totalorder %s46, 0
      %p162 = por %p160, %p161
      %s164 = sadd.s32 %s163, 1
      %p167 = scmp.eq.s32.totalorder %s40, 3
      %p168 = scmp.ne.s32.totalorder %s163, %s165
      %p169 = scmp.eq.s32.totalorder %s40, 0
      %p170 = por %p168, %p169
      %p171 = scmp.ne.s32.totalorder %s163, %s165
      %p172 = scmp.eq.s32.totalorder %s45, 3
      %p173 = por %p171, %p172
      %p174 = scmp.ne.s32.totalorder %s165, %s166
      %p175 = scmp.eq.s32.totalorder %s45, 0
      %p176 = por %p174, %p175
      %p177 = scmp.ne.s32.totalorder %s165, %s166
      %p178 = scmp.eq.s32.totalorder %s46, 3
      %p179 = por %p177, %p178
      %p181 = scmp.ne.s32.totalorder %s166, %s180
      %p182 = scmp.eq.s32.totalorder %s46, 0
      %p183 = por %p181, %p182
      %s185 = sadd.s32 %s184, 1
      %p188 = scmp.eq.s32.totalorder %s40, 3
      %p189 = scmp.ne.s32.totalorder %s184, %s186
      %p190 = scmp.eq.s32.totalorder %s40, 0
      %p191 = por %p189, %p190
      %p192 = scmp.ne.s32.totalorder %s184, %s186
      %p193 = scmp.eq.s32.totalorder %s45, 3
      %p194 = por %p192, %p193
      %p195 = scmp.ne.s32.totalorder %s186, %s187
      %p196 = scmp.eq.s32.totalorder %s45, 0
      %p197 = por %p195, %p196
      %p198 = scmp.ne.s32.totalorder %s186, %s187
      %p199 = scmp.eq.s32.totalorder %s46, 3
      %p200 = por %p198, %p199
      %p202 = scmp.ne.s32.totalorder %s187, %s201
      %p203 = scmp.eq.s32.totalorder %s46, 0
      %p204 = por %p202, %p203
      %s206 = sadd.s32 %s205, 1
      %p209 = scmp.eq.s32.totalorder %s40, 3
      %p210 = scmp.ne.s32.totalorder %s205, %s207
      %p211 = scmp.eq.s32.totalorder %s40, 0
      %p212 = por %p210, %p211
      %p213 = scmp.ne.s32.totalorder %s205, %s207
      %p214 = scmp.eq.s32.totalorder %s45, 3
      %p215 = por %p213, %p214
      %p216 = scmp.ne.s32.totalorder %s207, %s208
      %p217 = scmp.eq.s32.totalorder %s45, 0
      %p218 = por %p216, %p217
      %p219 = scmp.ne.s32.totalorder %s207, %s208
      %p220 = scmp.eq.s32.totalorder %s46, 3
      %p221 = por %p219, %p220
      %p223 = scmp.ne.s32.totalorder %s208, %s222
      %p224 = scmp.eq.s32.totalorder %s46, 0
      %p225 = por %p223, %p224
      %s227 = sadd.s32 %s226, 1
      %p230 = scmp.eq.s32.totalorder %s40, 3
      %p231 = scmp.ne.s32.totalorder %s226, %s228
      %p232 = scmp.eq.s32.totalorder %s40, 0
      %p233 = por %p231, %p232
      %p234 = scmp.ne.s32.totalorder %s226, %s228
      %p235 = scmp.eq.s32.totalorder %s45, 3
      %p236 = por %p234, %p235
      %p237 = scmp.ne.s32.totalorder %s228, %s229
      %p238 = scmp.eq.s32.totalorder %s45, 0
      %p239 = por %p237, %p238
      %p240 = scmp.ne.s32.totalorder %s228, %s229
      %p241 = scmp.eq.s32.totalorder %s46, 3
      %p242 = por %p240, %p241
      %p244 = scmp.ne.s32.totalorder %s229, %s243
      %p245 = scmp.eq.s32.totalorder %s46, 0
      %p246 = por %p244, %p245
      %s248 = sadd.s32 %s247, 1
      %p251 = scmp.eq.s32.totalorder %s40, 3
      %p252 = scmp.ne.s32.totalorder %s247, %s249
      %p253 = scmp.eq.s32.totalorder %s40, 0
      %p254 = por %p252, %p253
      %p255 = scmp.ne.s32.totalorder %s247, %s249
      %p256 = scmp.eq.s32.totalorder %s45, 3
      %p257 = por %p255, %p256
      %p258 = scmp.ne.s32.totalorder %s249, %s250
      %p259 = scmp.eq.s32.totalorder %s45, 0
      %p260 = por %p258, %p259
      %p261 = scmp.ne.s32.totalorder %s249, %s250
      %p262 = scmp.eq.s32.totalorder %s46, 3
      %p263 = por %p261, %p262
      %p265 = scmp.ne.s32.totalorder %s250, %s264
      %p266 = scmp.eq.s32.totalorder %s46, 0
      %p267 = por %p265, %p266
      %s269 = sadd.s32 %s268, 1
      %p272 = scmp.eq.s32.totalorder %s40, 3
      %p273 = scmp.ne.s32.totalorder %s268, %s270
      %p274 = scmp.eq.s32.totalorder %s40, 0
      %p275 = por %p273, %p274
      %p276 = scmp.ne.s32.totalorder %s268, %s270
      %p277 = scmp.eq.s32.totalorder %s45, 3
      %p278 = por %p276, %p277
      %p279 = scmp.ne.s32.totalorder %s270, %s271
      %p280 = scmp.eq.s32.totalorder %s45, 0
      %p281 = por %p279, %p280
      %p282 = scmp.ne.s32.totalorder %s270, %s271
      %p283 = scmp.eq.s32.totalorder %s46, 3
      %p284 = por %p282, %p283
      %p286 = scmp.ne.s32.totalorder %s271, %s285
      %p287 = scmp.eq.s32.totalorder %s46, 0
      %p288 = por %p286, %p287
      %s290 = sadd.s32 %s289, 1
      %p293 = scmp.eq.s32.totalorder %s40, 3
      %p294 = scmp.ne.s32.totalorder %s289, %s291
      %p295 = scmp.eq.s32.totalorder %s40, 0
      %p296 = por %p294, %p295
      %p297 = scmp.ne.s32.totalorder %s289, %s291
      %p298 = scmp.eq.s32.totalorder %s45, 3
      %p299 = por %p297, %p298
      %p300 = scmp.ne.s32.totalorder %s291, %s292
      %p301 = scmp.eq.s32.totalorder %s45, 0
      %p302 = por %p300, %p301
      %p303 = scmp.ne.s32.totalorder %s291, %s292
      %p304 = scmp.eq.s32.totalorder %s46, 3
      %p305 = por %p303, %p304
      %p307 = scmp.ne.s32.totalorder %s292, %s306
      %p308 = scmp.eq.s32.totalorder %s46, 0
      %p309 = por %p307, %p308
      %s311 = sadd.s32 %s310, 1
      %p314 = scmp.eq.s32.totalorder %s40, 3
      %p315 = scmp.ne.s32.totalorder %s310, %s312
      %p316 = scmp.eq.s32.totalorder %s40, 0
      %p317 = por %p315, %p316
      %p318 = scmp.ne.s32.totalorder %s310, %s312
      %p319 = scmp.eq.s32.totalorder %s45, 3
      %p320 = por %p318, %p319
      %p321 = scmp.ne.s32.totalorder %s312, %s313
      %p322 = scmp.eq.s32.totalorder %s45, 0
      %p323 = por %p321, %p322
      %p324 = scmp.ne.s32.totalorder %s312, %s313
      %p325 = scmp.eq.s32.totalorder %s46, 3
      %p326 = por %p324, %p325
      %p328 = scmp.ne.s32.totalorder %s313, %s327
      %p329 = scmp.eq.s32.totalorder %s46, 0
      %p330 = por %p328, %p329
      %s332 = sadd.s32 %s331, 1
      %p335 = scmp.eq.s32.totalorder %s40, 3
      %p336 = scmp.ne.s32.totalorder %s331, %s333
      %p337 = scmp.eq.s32.totalorder %s40, 0
      %p338 = por %p336, %p337
      %p339 = scmp.ne.s32.totalorder %s331, %s333
      %p340 = scmp.eq.s32.totalorder %s45, 3
      %p341 = por %p339, %p340
      %p342 = scmp.ne.s32.totalorder %s333, %s334
      %p343 = scmp.eq.s32.totalorder %s45, 0
      %p344 = por %p342, %p343
      %p345 = scmp.ne.s32.totalorder %s333, %s334
      %p346 = scmp.eq.s32.totalorder %s46, 3
      %p347 = por %p345, %p346
      %p349 = scmp.ne.s32.totalorder %s334, %s348
      %p350 = scmp.eq.s32.totalorder %s46, 0
      %p351 = por %p349, %p350
      %s353 = sadd.s32 %s352, 1
      %p356 = scmp.eq.s32.totalorder %s40, 3
      %p357 = scmp.ne.s32.totalorder %s352, %s354
      %p358 = scmp.eq.s32.totalorder %s40, 0
      %p359 = por %p357, %p358
      %p360 = scmp.ne.s32.totalorder %s352, %s354
      %p361 = scmp.eq.s32.totalorder %s45, 3
      %p362 = por %p360, %p361
      %p363 = scmp.ne.s32.totalorder %s354, %s355
      %p364 = scmp.eq.s32.totalorder %s45, 0
      %p365 = por %p363, %p364
      %p366 = scmp.ne.s32.totalorder %s354, %s355
      %p367 = scmp.eq.s32.totalorder %s46, 3
      %p368 = por %p366, %p367
      %p370 = scmp.ne.s32.totalorder %s355, %s369
      %p371 = scmp.eq.s32.totalorder %s46, 0
      %p372 = por %p370, %p371
      %s374 = sadd.s32 %s373, 1
      %p377 = scmp.eq.s32.totalorder %s40, 3
      %p378 = scmp.ne.s32.totalorder %s373, %s375
      %p379 = scmp.eq.s32.totalorder %s40, 0
      %p380 = por %p378, %p379
      %p381 = scmp.ne.s32.totalorder %s373, %s375
      %p382 = scmp.eq.s32.totalorder %s45, 3
      %p383 = por %p381, %p382
      %p384 = scmp.ne.s32.totalorder %s375, %s376
      %p385 = scmp.eq.s32.totalorder %s45, 0
      %p386 = por %p384, %p385
      %p387 = scmp.ne.s32.totalorder %s375, %s376
      %p388 = scmp.eq.s32.totalorder %s46, 3
      %p389 = por %p387, %p388
      %p391 = scmp.ne.s32.totalorder %s376, %s390
      %p392 = scmp.eq.s32.totalorder %s46, 0
      %p393 = por %p391, %p392
      %s395 = sadd.s32 %s394, 1
      %p398 = scmp.eq.s32.totalorder %s40, 3
      %p399 = scmp.ne.s32.totalorder %s394, %s396
      %p400 = scmp.eq.s32.totalorder %s40, 0
      %p401 = por %p399, %p400
      %p402 = scmp.ne.s32.totalorder %s394, %s396
      %p403 = scmp.eq.s32.totalorder %s45, 3
      %p404 = por %p402, %p403
      %p405 = scmp.ne.s32.totalorder %s396, %s397
      %p406 = scmp.eq.s32.totalorder %s45, 0
      %p407 = por %p405, %p406
      %p408 = scmp.ne.s32.totalorder %s396, %s397
      %p409 = scmp.eq.s32.totalorder %s46, 3
      %p410 = por %p408, %p409
      %p412 = scmp.ne.s32.totalorder %s397, %s411
      %p413 = scmp.eq.s32.totalorder %s46, 0
      %p414 = por %p412, %p413
      %s416 = sadd.s32 %s415, 1
      %p419 = scmp.eq.s32.totalorder %s40, 3
      %p420 = scmp.ne.s32.totalorder %s415, %s417
      %p421 = scmp.eq.s32.totalorder %s40, 0
      %p422 = por %p420, %p421
      %p423 = scmp.ne.s32.totalorder %s415, %s417
      %p424 = scmp.eq.s32.totalorder %s45, 3
      %p425 = por %p423, %p424
      %p426 = scmp.ne.s32.totalorder %s417, %s418
      %p427 = scmp.eq.s32.totalorder %s45, 0
      %p428 = por %p426, %p427
      %p429 = scmp.ne.s32.totalorder %s417, %s418
      %p430 = scmp.eq.s32.totalorder %s46, 3
      %p431 = por %p429, %p430
      %p433 = scmp.ne.s32.totalorder %s418, %s432
      %p434 = scmp.eq.s32.totalorder %s46, 0
      %p435 = por %p433, %p434
      %s437 = sadd.s32 %s436, 1
      %p440 = scmp.eq.s32.totalorder %s40, 3
      %p441 = scmp.ne.s32.totalorder %s436, %s438
      %p442 = scmp.eq.s32.totalorder %s40, 0
      %p443 = por %p441, %p442
      %p444 = scmp.ne.s32.totalorder %s436, %s438
      %p445 = scmp.eq.s32.totalorder %s45, 3
      %p446 = por %p444, %p445
      %p447 = scmp.ne.s32.totalorder %s438, %s439
      %p448 = scmp.eq.s32.totalorder %s45, 0
      %p449 = por %p447, %p448
      %p450 = scmp.ne.s32.totalorder %s438, %s439
      %p451 = scmp.eq.s32.totalorder %s46, 3
      %p452 = por %p450, %p451
      %p454 = scmp.ne.s32.totalorder %s439, %s453
      %p455 = scmp.eq.s32.totalorder %s46, 0
      %p456 = por %p454, %p455
      %s458 = sadd.s32 %s457, 1
      %p461 = scmp.eq.s32.totalorder %s40, 3
      %p462 = scmp.ne.s32.totalorder %s457, %s459
      %p463 = scmp.eq.s32.totalorder %s40, 0
      %p464 = por %p462, %p463
      %p465 = scmp.ne.s32.totalorder %s457, %s459
      %p466 = scmp.eq.s32.totalorder %s45, 3
      %p467 = por %p465, %p466
      %p468 = scmp.ne.s32.totalorder %s459, %s460
      %p469 = scmp.eq.s32.totalorder %s45, 0
      %p470 = por %p468, %p469
      %p471 = scmp.ne.s32.totalorder %s459, %s460
      %p472 = scmp.eq.s32.totalorder %s46, 3
      %p473 = por %p471, %p472
      %p475 = scmp.ne.s32.totalorder %s460, %s474
      %p476 = scmp.eq.s32.totalorder %s46, 0
      %p477 = por %p475, %p476
      %s479 = sadd.s32 %s478, 1
      %p482 = scmp.eq.s32.totalorder %s40, 3
      %p483 = scmp.ne.s32.totalorder %s478, %s480
      %p484 = scmp.eq.s32.totalorder %s40, 0
      %p485 = por %p483, %p484
      %p486 = scmp.ne.s32.totalorder %s478, %s480
      %p487 = scmp.eq.s32.totalorder %s45, 3
      %p488 = por %p486, %p487
      %p489 = scmp.ne.s32.totalorder %s480, %s481
      %p490 = scmp.eq.s32.totalorder %s45, 0
      %p491 = por %p489, %p490
      %p492 = scmp.ne.s32.totalorder %s480, %s481
      %p493 = scmp.eq.s32.totalorder %s46, 3
      %p494 = por %p492, %p493
      %p496 = scmp.ne.s32.totalorder %s481, %s495
      %p497 = scmp.eq.s32.totalorder %s46, 0
      %p498 = por %p496, %p497
      %p499 = scmp.le.s32.totalorder 1, %s40
      %p500 = scmp.lt.s32.totalorder %s40, 5
      %p501 = pnand %p499, %p500
      %p502 = pneg %p501
      // Predicated region
      $region9: #{tpu_custom_call.1} parent=5 // pred_check
        _
      $region10: #{tpu_custom_call.1} parent=5 // pred_check_branch
        %504 = sbr.rel (%p501) target = $region12
      $region11: #{tpu_custom_call.1} parent=5 // pred_region
        %s505 = ssub.s32 %s40, 1
        // Predicated region
        $region13: #{tpu_custom_call.1} parent=11 // pred_check
          %p506 = pneg %p113
        $region14: #{tpu_custom_call.1} parent=11 // pred_check_branch
          %508 = sbr.rel (%p506) target = $region16
        $region15: #{tpu_custom_call.1} parent=11 // pred_region
          %510 = vsyncadd [#allocation7], 0
          %s511 = sshll.u32 %s2, 4
          %s512 = int_to_ptr.hbm [resolvable:$true] %s511
          %s513 = sshll.u32 [#allocation8], 4
          %s514 = int_to_ptr.vmem [resolvable:$true] %s513
          %519 = dma.hbm_to_vmem [thread:$0]  %s512, 2048, %s514, [#allocation7], 128, 128, 8
        $region16: #{tpu_custom_call.1} parent=11 // pred_fallthru
          _
        // Predicated region
        $region17: #{tpu_custom_call.1} parent=11 // pred_check
          %p520 = pneg %p134
        $region18: #{tpu_custom_call.1} parent=11 // pred_check_branch
          %522 = sbr.rel (%p520) target = $region20
        $region19: #{tpu_custom_call.1} parent=11 // pred_region
          %524 = vsyncadd [#allocation10], 0
          %s525 = sshll.u32 %s3, 4
          %s526 = int_to_ptr.hbm [resolvable:$true] %s525
          %s527 = sshll.u32 [#allocation9], 4
          %s528 = int_to_ptr.vmem [resolvable:$true] %s527
          %533 = dma.hbm_to_vmem [thread:$0]  %s526, 2048, %s528, [#allocation10], 128, 128, 8
        $region20: #{tpu_custom_call.1} parent=11 // pred_fallthru
          _
        // Predicated region
        $region21: #{tpu_custom_call.1} parent=11 // pred_check
          %p534 = pneg %p155
        $region22: #{tpu_custom_call.1} parent=11 // pred_check_branch
          %536 = sbr.rel (%p534) target = $region24
        $region23: #{tpu_custom_call.1} parent=11 // pred_region
          _
        $region24: #{tpu_custom_call.1} parent=11 // pred_fallthru
          _
        // Predicated region
        $region25: #{tpu_custom_call.1} parent=11 // pred_check
          %p537 = pneg %p176
        $region26: #{tpu_custom_call.1} parent=11 // pred_check_branch
          %539 = sbr.rel (%p537) target = $region28
        $region27: #{tpu_custom_call.1} parent=11 // pred_region
          %541 = vsyncadd [#allocation10], 0
          %s542 = sshll.u32 %s5, 4
          %s543 = int_to_ptr.hbm [resolvable:$true] %s542
          %s544 = sshll.u32 [#allocation11], 4
          %s545 = int_to_ptr.vmem [resolvable:$true] %s544
          %550 = dma.hbm_to_vmem [thread:$0]  %s543, 384, %s545, [#allocation10], 128, 128, 8
        $region28: #{tpu_custom_call.1} parent=11 // pred_fallthru
          _
        // Predicated region
        $region29: #{tpu_custom_call.1} parent=11 // pred_check
          %p551 = pneg %p197
        $region30: #{tpu_custom_call.1} parent=11 // pred_check_branch
          %553 = sbr.rel (%p551) target = $region32
        $region31: #{tpu_custom_call.1} parent=11 // pred_region
          _
        $region32: #{tpu_custom_call.1} parent=11 // pred_fallthru
          _
        // Predicated region
        $region33: #{tpu_custom_call.1} parent=11 // pred_check
          %p554 = pneg %p218
        $region34: #{tpu_custom_call.1} parent=11 // pred_check_branch
          %556 = sbr.rel (%p554) target = $region36
        $region35: #{tpu_custom_call.1} parent=11 // pred_region
          %558 = vsyncadd [#allocation13], 0
          %s560 = sshll.u32 %s7, 4
          %s561 = int_to_ptr.hbm [resolvable:$true] %s560
          %s562 = sshll.u32 [#allocation12], 4
          %s563 = int_to_ptr.vmem [resolvable:$true] %s562
          %565 = dma.hbm_to_vmem [thread:$0]  %s561, 128, %s563, [#allocation13]
        $region36: #{tpu_custom_call.1} parent=11 // pred_fallthru
          _
        // Predicated region
        $region37: #{tpu_custom_call.1} parent=11 // pred_check
          %p566 = pneg %p239
        $region38: #{tpu_custom_call.1} parent=11 // pred_check_branch
          %568 = sbr.rel (%p566) target = $region40
        $region39: #{tpu_custom_call.1} parent=11 // pred_region
          %570 = vsyncadd [#allocation13], 0
          %s571 = sshll.u32 %s8, 4
          %s572 = int_to_ptr.hbm [resolvable:$true] %s571
          %s573 = sshll.u32 [#allocation14], 4
          %s574 = int_to_ptr.vmem [resolvable:$true] %s573
          %579 = dma.hbm_to_vmem [thread:$0]  %s572, 384, %s574, [#allocation13], 128, 128, 8
        $region40: #{tpu_custom_call.1} parent=11 // pred_fallthru
          _
        // Predicated region
        $region41: #{tpu_custom_call.1} parent=11 // pred_check
          %p580 = pneg %p260
        $region42: #{tpu_custom_call.1} parent=11 // pred_check_branch
          %582 = sbr.rel (%p580) target = $region44
        $region43: #{tpu_custom_call.1} parent=11 // pred_region
          %584 = vsyncadd [#allocation16], 0
          %s586 = sshll.u32 %s9, 4
          %s587 = int_to_ptr.hbm [resolvable:$true] %s586
          %s588 = sshll.u32 [#allocation15], 4
          %s589 = int_to_ptr.vmem [resolvable:$true] %s588
          %591 = dma.hbm_to_vmem [thread:$0]  %s587, 16, %s589, [#allocation16]
        $region44: #{tpu_custom_call.1} parent=11 // pred_fallthru
          _
        // Predicated region
        $region45: #{tpu_custom_call.1} parent=11 // pred_check
          %p592 = pneg %p281
        $region46: #{tpu_custom_call.1} parent=11 // pred_check_branch
          %594 = sbr.rel (%p592) target = $region48
        $region47: #{tpu_custom_call.1} parent=11 // pred_region
          %596 = vsyncadd [#allocation16], 0
          %s597 = sshll.u32 %s10, 4
          %s598 = int_to_ptr.hbm [resolvable:$true] %s597
          %s599 = sshll.u32 [#allocation17], 4
          %s600 = int_to_ptr.vmem [resolvable:$true] %s599
          %605 = dma.hbm_to_vmem [thread:$0]  %s598, 384, %s600, [#allocation16], 128, 128, 8
        $region48: #{tpu_custom_call.1} parent=11 // pred_fallthru
          _
        // Predicated region
        $region49: #{tpu_custom_call.1} parent=11 // pred_check
          %p606 = pneg %p302
        $region50: #{tpu_custom_call.1} parent=11 // pred_check_branch
          %608 = sbr.rel (%p606) target = $region52
        $region51: #{tpu_custom_call.1} parent=11 // pred_region
          _
        $region52: #{tpu_custom_call.1} parent=11 // pred_fallthru
          _
        // Predicated region
        $region53: #{tpu_custom_call.1} parent=11 // pred_check
          %p609 = pneg %p323
        $region54: #{tpu_custom_call.1} parent=11 // pred_check_branch
          %611 = sbr.rel (%p609) target = $region56
        $region55: #{tpu_custom_call.1} parent=11 // pred_region
          %613 = vsyncadd [#allocation19], 0
          %s615 = sshll.u32 %s12, 4
          %s616 = int_to_ptr.hbm [resolvable:$true] %s615
          %s617 = sshll.u32 [#allocation18], 4
          %s618 = int_to_ptr.vmem [resolvable:$true] %s617
          %620 = dma.hbm_to_vmem [thread:$0]  %s616, 128, %s618, [#allocation19]
        $region56: #{tpu_custom_call.1} parent=11 // pred_fallthru
          _
        // Predicated region
        $region57: #{tpu_custom_call.1} parent=11 // pred_check
          %p621 = pneg %p344
        $region58: #{tpu_custom_call.1} parent=11 // pred_check_branch
          %623 = sbr.rel (%p621) target = $region60
        $region59: #{tpu_custom_call.1} parent=11 // pred_region
          %625 = vsyncadd [#allocation19], 0
          %s626 = sshll.u32 %s13, 4
          %s627 = int_to_ptr.hbm [resolvable:$true] %s626
          %s628 = sshll.u32 [#allocation20], 4
          %s629 = int_to_ptr.vmem [resolvable:$true] %s628
          %634 = dma.hbm_to_vmem [thread:$0]  %s627, 384, %s629, [#allocation19], 128, 128, 8
        $region60: #{tpu_custom_call.1} parent=11 // pred_fallthru
          _
        // Predicated region
        $region61: #{tpu_custom_call.1} parent=11 // pred_check
          %p635 = pneg %p365
        $region62: #{tpu_custom_call.1} parent=11 // pred_check_branch
          %637 = sbr.rel (%p635) target = $region64
        $region63: #{tpu_custom_call.1} parent=11 // pred_region
          _
        $region64: #{tpu_custom_call.1} parent=11 // pred_fallthru
          _
        // Predicated region
        $region65: #{tpu_custom_call.1} parent=11 // pred_check
          %p638 = pneg %p386
        $region66: #{tpu_custom_call.1} parent=11 // pred_check_branch
          %640 = sbr.rel (%p638) target = $region68
        $region67: #{tpu_custom_call.1} parent=11 // pred_region
          _
        $region68: #{tpu_custom_call.1} parent=11 // pred_fallthru
          _
        // Predicated region
        $region69: #{tpu_custom_call.1} parent=11 // pred_check
          %p641 = pneg %p407
        $region70: #{tpu_custom_call.1} parent=11 // pred_check_branch
          %643 = sbr.rel (%p641) target = $region72
        $region71: #{tpu_custom_call.1} parent=11 // pred_region
          _
        $region72: #{tpu_custom_call.1} parent=11 // pred_fallthru
          _
        // Predicated region
        $region73: #{tpu_custom_call.1} parent=11 // pred_check
          %p644 = pneg %p428
        $region74: #{tpu_custom_call.1} parent=11 // pred_check_branch
          %646 = sbr.rel (%p644) target = $region76
        $region75: #{tpu_custom_call.1} parent=11 // pred_region
          %648 = vsyncadd [#allocation22], 0
          %s649 = sshll.u32 %s17, 4
          %s650 = int_to_ptr.hbm [resolvable:$true] %s649
          %s651 = sshll.u32 [#allocation21], 4
          %s652 = int_to_ptr.vmem [resolvable:$true] %s651
          %657 = dma.hbm_to_vmem [thread:$0]  %s650, 2048, %s652, [#allocation22], 128, 128, 8
        $region76: #{tpu_custom_call.1} parent=11 // pred_fallthru
          _
      $region12: #{tpu_custom_call.1} parent=5 // pred_fallthru
        _
      %p658 = scmp.lt.s32.totalorder %s40, 4
      // Predicated region
      $region77: #{tpu_custom_call.1} parent=5 // pred_check
        %p659 = pneg %p658
      $region78: #{tpu_custom_call.1} parent=5 // pred_check_branch
        %661 = sbr.rel (%p659) target = $region80
      $region79: #{tpu_custom_call.1} parent=5 // pred_region
        // Predicated region
        $region81: #{tpu_custom_call.1} parent=79 // pred_check
          %p662 = pneg %p60
        $region82: #{tpu_custom_call.1} parent=79 // pred_check_branch
          %664 = sbr.rel (%p662) target = $region84
        $region83: #{tpu_custom_call.1} parent=79 // pred_region
          %s665 = sand.u32 %s50, 1
          %s666 = scalar_lea.sflag [#allocation4], %s665
          %s667 = sand.u32 %s50, 1
          %s668 = smul.addr %s667, 16
          %s669 = scalar_lea.vmem [#allocation3], %s668
          %671 = vsyncadd %s666, 0
          %s672 = smul.addr %s40, 2
          %s673 = smul.addr %s672, 8
          %s674 = scalar_lea.hbm %s0, %s673
          %s675 = sshll.u32 %s674, 4
          %s676 = int_to_ptr.hbm [resolvable:$true] %s675
          %s677 = sshll.u32 %s669, 4
          %s678 = int_to_ptr.vmem [resolvable:$true] %s677
          %683 = dma.hbm_to_vmem [thread:$0]  %s676, 256, %s678, %s666, 128, 128, 8
        $region84: #{tpu_custom_call.1} parent=79 // pred_fallthru
          _
        // Predicated region
        $region85: #{tpu_custom_call.1} parent=79 // pred_check
          %p684 = pneg %p86
        $region86: #{tpu_custom_call.1} parent=79 // pred_check_branch
          %686 = sbr.rel (%p684) target = $region88
        $region87: #{tpu_custom_call.1} parent=79 // pred_region
          %s687 = sand.u32 %s40, 1
          %s688 = scalar_lea.sflag [#allocation7], %s687
          %s689 = sand.u32 %s76, 1
          %s690 = smul.addr %s689, 16
          %s691 = scalar_lea.vmem [#allocation6], %s690
          %693 = vsyncadd %s688, 0
          %s694 = smul.addr %s40, 2
          %s695 = smul.addr %s694, 8
          %s696 = scalar_lea.hbm %s1, %s695
          %s697 = sshll.u32 %s696, 4
          %s698 = int_to_ptr.hbm [resolvable:$true] %s697
          %s699 = sshll.u32 %s691, 4
          %s700 = int_to_ptr.vmem [resolvable:$true] %s699
          %705 = dma.hbm_to_vmem [thread:$0]  %s698, 256, %s700, %s688, 128, 128, 8
        $region88: #{tpu_custom_call.1} parent=79 // pred_fallthru
          _
      $region80: #{tpu_custom_call.1} parent=5 // pred_fallthru
        _
      %p706 = scmp.le.s32.totalorder 1, %s40
      %p707 = scmp.lt.s32.totalorder %s40, 5
      %p708 = pnand %p706, %p707
      %p709 = pneg %p708
      // Predicated region
      $region89: #{tpu_custom_call.1} parent=5 // pred_check
        _
      $region90: #{tpu_custom_call.1} parent=5 // pred_check_branch
        %711 = sbr.rel (%p708) target = $region92
      $region91: #{tpu_custom_call.1} parent=5 // pred_region
        %s712 = ssub.s32 %s40, 1
        %s713 = sand.u32 %s53, 1
        %s714 = scalar_lea.sflag [#allocation4], %s713
        %s715 = sand.u32 %s53, 1
        %s716 = smul.addr %s715, 16
        %s717 = scalar_lea.vmem [#allocation3], %s716
        // Predicated region
        $region93: #{tpu_custom_call.1} parent=91 // pred_check
          %p718 = pneg %p66
        $region94: #{tpu_custom_call.1} parent=91 // pred_check_branch
          %720 = sbr.rel (%p718) target = $region96
        $region95: #{tpu_custom_call.1} parent=91 // pred_region
          %722 = dma.done %s714, 256
        $region96: #{tpu_custom_call.1} parent=91 // pred_fallthru
          _
        %s723 = sand.u32 %s45, 1
        %s724 = scalar_lea.sflag [#allocation7], %s723
        %s725 = sand.u32 %s79, 1
        %s726 = smul.addr %s725, 16
        %s727 = scalar_lea.vmem [#allocation6], %s726
        // Predicated region
        $region97: #{tpu_custom_call.1} parent=91 // pred_check
          %p728 = pneg %p92
        $region98: #{tpu_custom_call.1} parent=91 // pred_check_branch
          %730 = sbr.rel (%p728) target = $region100
        $region99: #{tpu_custom_call.1} parent=91 // pred_region
          %732 = dma.done %s724, 256
        $region100: #{tpu_custom_call.1} parent=91 // pred_fallthru
          _
        // Predicated region
        $region101: #{tpu_custom_call.1} parent=91 // pred_check
          %p733 = pneg %p113
        $region102: #{tpu_custom_call.1} parent=91 // pred_check_branch
          %735 = sbr.rel (%p733) target = $region104
        $region103: #{tpu_custom_call.1} parent=91 // pred_region
          %737 = dma.done [#allocation7], 2048
        $region104: #{tpu_custom_call.1} parent=91 // pred_fallthru
          _
        // Predicated region
        $region105: #{tpu_custom_call.1} parent=91 // pred_check
          %p738 = pneg %p134
        $region106: #{tpu_custom_call.1} parent=91 // pred_check_branch
          %740 = sbr.rel (%p738) target = $region108
        $region107: #{tpu_custom_call.1} parent=91 // pred_region
          %742 = dma.done [#allocation10], 2048
        $region108: #{tpu_custom_call.1} parent=91 // pred_fallthru
          _
        // Predicated region
        $region109: #{tpu_custom_call.1} parent=91 // pred_check
          %p743 = pneg %p176
        $region110: #{tpu_custom_call.1} parent=91 // pred_check_branch
          %745 = sbr.rel (%p743) target = $region112
        $region111: #{tpu_custom_call.1} parent=91 // pred_region
          %747 = dma.done [#allocation10], 384
        $region112: #{tpu_custom_call.1} parent=91 // pred_fallthru
          _
        // Predicated region
        $region113: #{tpu_custom_call.1} parent=91 // pred_check
          %p748 = pneg %p218
        $region114: #{tpu_custom_call.1} parent=91 // pred_check_branch
          %750 = sbr.rel (%p748) target = $region116
        $region115: #{tpu_custom_call.1} parent=91 // pred_region
          %752 = dma.done [#allocation13], 128
        $region116: #{tpu_custom_call.1} parent=91 // pred_fallthru
          _
        // Predicated region
        $region117: #{tpu_custom_call.1} parent=91 // pred_check
          %p753 = pneg %p239
        $region118: #{tpu_custom_call.1} parent=91 // pred_check_branch
          %755 = sbr.rel (%p753) target = $region120
        $region119: #{tpu_custom_call.1} parent=91 // pred_region
          %757 = dma.done [#allocation13], 384
        $region120: #{tpu_custom_call.1} parent=91 // pred_fallthru
          _
        // Predicated region
        $region121: #{tpu_custom_call.1} parent=91 // pred_check
          %p758 = pneg %p260
        $region122: #{tpu_custom_call.1} parent=91 // pred_check_branch
          %760 = sbr.rel (%p758) target = $region124
        $region123: #{tpu_custom_call.1} parent=91 // pred_region
          %762 = dma.done [#allocation16], 16
        $region124: #{tpu_custom_call.1} parent=91 // pred_fallthru
          _
        // Predicated region
        $region125: #{tpu_custom_call.1} parent=91 // pred_check
          %p763 = pneg %p281
        $region126: #{tpu_custom_call.1} parent=91 // pred_check_branch
          %765 = sbr.rel (%p763) target = $region128
        $region127: #{tpu_custom_call.1} parent=91 // pred_region
          %767 = dma.done [#allocation16], 384
        $region128: #{tpu_custom_call.1} parent=91 // pred_fallthru
          _
        // Predicated region
        $region129: #{tpu_custom_call.1} parent=91 // pred_check
          %p768 = pneg %p323
        $region130: #{tpu_custom_call.1} parent=91 // pred_check_branch
          %770 = sbr.rel (%p768) target = $region132
        $region131: #{tpu_custom_call.1} parent=91 // pred_region
          %772 = dma.done [#allocation19], 128
        $region132: #{tpu_custom_call.1} parent=91 // pred_fallthru
          _
        // Predicated region
        $region133: #{tpu_custom_call.1} parent=91 // pred_check
          %p773 = pneg %p344
        $region134: #{tpu_custom_call.1} parent=91 // pred_check_branch
          %775 = sbr.rel (%p773) target = $region136
        $region135: #{tpu_custom_call.1} parent=91 // pred_region
          %777 = dma.done [#allocation19], 384
        $region136: #{tpu_custom_call.1} parent=91 // pred_fallthru
          _
        // Predicated region
        $region137: #{tpu_custom_call.1} parent=91 // pred_check
          %p778 = pneg %p428
        $region138: #{tpu_custom_call.1} parent=91 // pred_check_branch
          %780 = sbr.rel (%p778) target = $region140
        $region139: #{tpu_custom_call.1} parent=91 // pred_region
          %782 = dma.done [#allocation22], 2048
        $region140: #{tpu_custom_call.1} parent=91 // pred_fallthru
          _
        %s783 = sand.u32 %s53, 1
        %s784 = scalar_lea.sflag [#allocation4], %s783
        %s785 = sand.u32 %s53, 1
        %s786 = smul.addr %s785, 16
        %s787 = scalar_lea.vmem [#allocation3], %s786
        %p788 = pneg %p66
        %p789 = pneg %p63
        %s790 = sand.u32 %s45, 1
        %s791 = scalar_lea.sflag [#allocation7], %s790
        %s792 = sand.u32 %s79, 1
        %s793 = smul.addr %s792, 16
        %s794 = scalar_lea.vmem [#allocation6], %s793
        %p795 = pneg %p92
        %p796 = pneg %p89
        %p797 = pneg %p113
        %p798 = pneg %p110
        %p799 = pneg %p134
        %p800 = pneg %p131
        %p801 = pneg %p155
        %p802 = pneg %p152
        %p803 = pneg %p176
        %p804 = pneg %p173
        %p805 = pneg %p197
        %p806 = pneg %p194
        %p807 = pneg %p218
        %p808 = pneg %p215
        %p809 = pneg %p239
        %p810 = pneg %p236
        %p811 = pneg %p260
        %p812 = pneg %p257
        %p813 = pneg %p281
        %p814 = pneg %p278
        %p815 = pneg %p302
        %p816 = pneg %p299
        %p817 = pneg %p323
        %p818 = pneg %p320
        %p819 = pneg %p344
        %p820 = pneg %p341
        %p821 = pneg %p365
        %p822 = pneg %p362
        %p823 = pneg %p386
        %p824 = pneg %p383
        %p825 = pneg %p407
        %p826 = pneg %p404
        %p827 = pneg %p428
        %p828 = pneg %p425
        %p829 = pneg %p449
        %p830 = pneg %p446
        %p831 = pneg %p470
        %p832 = pneg %p467
        %p833 = pneg %p491
        %p834 = pneg %p488
        %p835 = scmp.eq.s32.totalorder %s45, 0
        // Predicated region
        $region141: #{tpu_custom_call.1} parent=91 // pred_check
          %p836 = pneg %p835
        $region142: #{tpu_custom_call.1} parent=91 // pred_check_branch
          %838 = sbr.rel (%p836) target = $region144
        $region143: #{tpu_custom_call.1} parent=91 // pred_region
          %v839 = vld [vmem:[#allocation8] sm:$0xff]
          %v840 = vld [vmem:[#allocation8 + $0x8] sm:$0xff]
          %v841 = vld [vmem:[#allocation8 + $0x10] sm:$0xff]
          %v842 = vld [vmem:[#allocation8 + $0x18] sm:$0xff]
          %v843 = vld [vmem:[#allocation8 + $0x20] sm:$0xff]
          %v844 = vld [vmem:[#allocation8 + $0x28] sm:$0xff]
          %v845 = vld [vmem:[#allocation8 + $0x30] sm:$0xff]
          %v846 = vld [vmem:[#allocation8 + $0x38] sm:$0xff]
          %v847 = vld [vmem:[#allocation8 + $0x40] sm:$0xff]
          %v848 = vld [vmem:[#allocation8 + $0x48] sm:$0xff]
          %v849 = vld [vmem:[#allocation8 + $0x50] sm:$0xff]
          %v850 = vld [vmem:[#allocation8 + $0x58] sm:$0xff]
          %v851 = vld [vmem:[#allocation8 + $0x60] sm:$0xff]
          %v852 = vld [vmem:[#allocation8 + $0x68] sm:$0xff]
          %v853 = vld [vmem:[#allocation8 + $0x70] sm:$0xff]
          %v854 = vld [vmem:[#allocation8 + $0x78] sm:$0xff]
          %855 = vst [vmem:[#allocation24] sm:$0xff] %v839
          %856 = vst [vmem:[#allocation24 + $0x8] sm:$0xff] %v840
          %857 = vst [vmem:[#allocation24 + $0x10] sm:$0xff] %v841
          %858 = vst [vmem:[#allocation24 + $0x18] sm:$0xff] %v842
          %859 = vst [vmem:[#allocation24 + $0x20] sm:$0xff] %v843
          %860 = vst [vmem:[#allocation24 + $0x28] sm:$0xff] %v844
          %861 = vst [vmem:[#allocation24 + $0x30] sm:$0xff] %v845
          %862 = vst [vmem:[#allocation24 + $0x38] sm:$0xff] %v846
          %863 = vst [vmem:[#allocation24 + $0x40] sm:$0xff] %v847
          %864 = vst [vmem:[#allocation24 + $0x48] sm:$0xff] %v848
          %865 = vst [vmem:[#allocation24 + $0x50] sm:$0xff] %v849
          %866 = vst [vmem:[#allocation24 + $0x58] sm:$0xff] %v850
          %867 = vst [vmem:[#allocation24 + $0x60] sm:$0xff] %v851
          %868 = vst [vmem:[#allocation24 + $0x68] sm:$0xff] %v852
          %869 = vst [vmem:[#allocation24 + $0x70] sm:$0xff] %v853
          %870 = vst [vmem:[#allocation24 + $0x78] sm:$0xff] %v854
          %v871 = vld [vmem:[#allocation9] sm:$0xff]
          %v872 = vld [vmem:[#allocation9 + $0x8] sm:$0xff]
          %v873 = vld [vmem:[#allocation9 + $0x10] sm:$0xff]
          %v874 = vld [vmem:[#allocation9 + $0x18] sm:$0xff]
          %v875 = vld [vmem:[#allocation9 + $0x20] sm:$0xff]
          %v876 = vld [vmem:[#allocation9 + $0x28] sm:$0xff]
          %v877 = vld [vmem:[#allocation9 + $0x30] sm:$0xff]
          %v878 = vld [vmem:[#allocation9 + $0x38] sm:$0xff]
          %v879 = vld [vmem:[#allocation9 + $0x40] sm:$0xff]
          %v880 = vld [vmem:[#allocation9 + $0x48] sm:$0xff]
          %v881 = vld [vmem:[#allocation9 + $0x50] sm:$0xff]
          %v882 = vld [vmem:[#allocation9 + $0x58] sm:$0xff]
          %v883 = vld [vmem:[#allocation9 + $0x60] sm:$0xff]
          %v884 = vld [vmem:[#allocation9 + $0x68] sm:$0xff]
          %v885 = vld [vmem:[#allocation9 + $0x70] sm:$0xff]
          %v886 = vld [vmem:[#allocation9 + $0x78] sm:$0xff]
          %887 = vst [vmem:[#allocation26] sm:$0xff] %v871
          %888 = vst [vmem:[#allocation26 + $0x8] sm:$0xff] %v872
          %889 = vst [vmem:[#allocation26 + $0x10] sm:$0xff] %v873
          %890 = vst [vmem:[#allocation26 + $0x18] sm:$0xff] %v874
          %891 = vst [vmem:[#allocation26 + $0x20] sm:$0xff] %v875
          %892 = vst [vmem:[#allocation26 + $0x28] sm:$0xff] %v876
          %893 = vst [vmem:[#allocation26 + $0x30] sm:$0xff] %v877
          %894 = vst [vmem:[#allocation26 + $0x38] sm:$0xff] %v878
          %895 = vst [vmem:[#allocation26 + $0x40] sm:$0xff] %v879
          %896 = vst [vmem:[#allocation26 + $0x48] sm:$0xff] %v880
          %897 = vst [vmem:[#allocation26 + $0x50] sm:$0xff] %v881
          %898 = vst [vmem:[#allocation26 + $0x58] sm:$0xff] %v882
          %899 = vst [vmem:[#allocation26 + $0x60] sm:$0xff] %v883
          %900 = vst [vmem:[#allocation26 + $0x68] sm:$0xff] %v884
          %901 = vst [vmem:[#allocation26 + $0x70] sm:$0xff] %v885
          %902 = vst [vmem:[#allocation26 + $0x78] sm:$0xff] %v886
        $region144: #{tpu_custom_call.1} parent=91 // pred_fallthru
          _
        %v903 = vld [vmem:[%s717] sm:$0xff]
        %v904 = vld [vmem:[%s717 + $0x8] sm:$0xff]
        %v905 = vld [vmem:[%s727] sm:$0xff]
        %v906 = vld [vmem:[%s727 + $0x8] sm:$0xff]
        %v907 = vld [vmem:[%s4] sm:$0x1]
        %v909 = vperm.slane %v907, 0
        %v911 = vmul.f32 %v905, %v909
        %v912 = vmul.f32 %v906, %v909
        %913 = vadd.xlane.f32.xlu0 %v911
        %v914 = vpop.xlane.xlu0 %913
        %915 = vadd.xlane.f32.xlu0 %v912
        %v916 = vpop.xlane.xlu0 %915
        %917 = vmatpush.xpose.msra.mxu0 0.0
        %918 = vmatpush.xpose.msra.mxu0 0.0
        %919 = vmatpush.xpose.msra.mxu0 0.0
        %920 = vmatpush.xpose.msra.mxu0 0.0
        %921 = vmatpush.xpose.msra.mxu0 0.0
        %922 = vmatpush.xpose.msra.mxu0 0.0
        %923 = vmatpush.xpose.msra.mxu0 0.0
        %924 = vmatpush.xpose.msra.mxu0 0.0
        %925 = vmatpush.xpose.msra.mxu0 0.0
        %926 = vmatpush.xpose.msra.mxu0 0.0
        %927 = vmatpush.xpose.msra.mxu0 0.0
        %928 = vmatpush.xpose.msra.mxu0 0.0
        %929 = vmatpush.xpose.msra.mxu0 0.0
        %930 = vmatpush.xpose.msra.mxu0 0.0
        %931 = vmatpush.xpose.msra.mxu0 %v906
        %932 = vmatpush.xpose.msra.mxu0 %v905
        %933 = vmatmul.f32.gmra.mxu0 %v907
        %v934 = vpop.f32.mrf.mxu0
        %v935 = vadd.f32 0.0, %v934
        %936 = vdwg.mxu0
        %v937 = vlaneseq
        %v938 = vshrl.u32 %v937, 7
        %v939 = vadd.s32 %v938, 8
        %v940 = vlaneseq
        %v941 = vand.u32 %v940, 127
        %v942 = vperm.slane %v935, 0
        %vm943 = vcmp.gt.f32.partialorder %v942, %v914
        %vm944 = vcmp.gt.f32.partialorder %v942, %v916
        %vm945 = vcmp.eq.f32.partialorder %v942, %v914
        %vm946 = vcmp.eq.f32.partialorder %v942, %v916
        %vm947 = vcmp.lt.s32.totalorder %v941, %v938
        %vm948 = vcmp.lt.s32.totalorder %v941, %v939
        %vm949 = vmand %vm945, %vm947
        %vm950 = vmand %vm946, %vm948
        %vm951 = vmor %vm943, %vm949
        %vm952 = vmor %vm944, %vm950
        %v953 = vsel %vm951, 1, 0
        %v954 = vsel %vm952, 1, 0
        %v955 = vcvt.s32.f32 %v953
        %v956 = vcvt.s32.f32 %v954
        %vm957 = vcmask 130048
        %v958 = vsel %vm957, %v955, 0.0
        %959 = vadd.xlane.f32.xlu0 %v958
        %v960 = vpop.xlane.xlu0 %959
        %v961 = vsel %vm957, %v956, 0.0
        %962 = vadd.xlane.f32.xlu0 %v961
        %v963 = vpop.xlane.xlu0 %962
        %v964 = vcvt.s32.f32 %v941
        %vm965 = vcmp.eq.f32.partialorder %v964, %v960
        %vm966 = vcmp.eq.f32.partialorder %v964, %v963
        %vm967 = vcmp.lt.s32.totalorder %v941, 8
        %vm968 = vmand %vm965, %vm967
        %vm969 = vmand %vm966, %vm967
        %v970 = vsel %vm968, %v914, 0.0
        %v971 = vsel %vm969, %v916, 0.0
        %972 = vxpose.xlu0.b32.start [1/16] %v905, 128
        %973 = vxpose.xlu0.b32.cont [2/16] %v906, 128
        %974 = vxpose.xlu0.b32.cont [3/16] 0.0, 128
        %975 = vxpose.xlu0.b32.cont [4/16] 0.0, 128
        %976 = vxpose.xlu0.b32.cont [5/16] 0.0, 128
        %977 = vxpose.xlu0.b32.cont [6/16] 0.0, 128
        %978 = vxpose.xlu0.b32.cont [7/16] 0.0, 128
        %979 = vxpose.xlu0.b32.cont [8/16] 0.0, 128
        %980 = vxpose.xlu0.b32.cont [9/16] 0.0, 128
        %981 = vxpose.xlu0.b32.cont [10/16] 0.0, 128
        %982 = vxpose.xlu0.b32.cont [11/16] 0.0, 128
        %983 = vxpose.xlu0.b32.cont [12/16] 0.0, 128
        %984 = vxpose.xlu0.b32.cont [13/16] 0.0, 128
        %985 = vxpose.xlu0.b32.cont [14/16] 0.0, 128
        %986 = vxpose.xlu0.b32.cont [15/16] 0.0, 128
        %987 = vxpose.xlu0.b32.end [16/16] 0.0, 128
        %v988 = vpop.trf.xlu0
        %v989 = vpop.trf.xlu0
        %v990 = vpop.trf.xlu0
        %v991 = vpop.trf.xlu0
        %v992 = vpop.trf.xlu0
        %v993 = vpop.trf.xlu0
        %v994 = vpop.trf.xlu0
        %v995 = vpop.trf.xlu0
        %v996 = vpop.trf.xlu0
        %v997 = vpop.trf.xlu0
        %v998 = vpop.trf.xlu0
        %v999 = vpop.trf.xlu0
        %v1000 = vpop.trf.xlu0
        %v1001 = vpop.trf.xlu0
        %v1002 = vpop.trf.xlu0
        %v1003 = vpop.trf.xlu0
        %v1005 = vsel %vm957, %v988, 0
        %v1008 = vsel %vm957, %v989, 0
        %v1011 = vsel %vm957, %v990, 0
        %v1014 = vsel %vm957, %v991, 0
        %v1017 = vsel %vm957, %v992, 0
        %v1020 = vsel %vm957, %v993, 0
        %v1023 = vsel %vm957, %v994, 0
        %v1026 = vsel %vm957, %v995, 0
        %v1029 = vsel %vm957, %v996, 0
        %v1032 = vsel %vm957, %v997, 0
        %v1035 = vsel %vm957, %v998, 0
        %v1038 = vsel %vm957, %v999, 0
        %v1041 = vsel %vm957, %v1000, 0
        %v1044 = vsel %vm957, %v1001, 0
        %v1047 = vsel %vm957, %v1002, 0
        %v1050 = vsel %vm957, %v1003, 0
        %1052 = vmatpush.msra.mxu0 0.0
        %1053 = vmatpush.msra.mxu0 0.0
        %1054 = vmatpush.msra.mxu0 0.0
        %1055 = vmatpush.msra.mxu0 0.0
        %1056 = vmatpush.msra.mxu0 0.0
        %1057 = vmatpush.msra.mxu0 0.0
        %1058 = vmatpush.msra.mxu0 0.0
        %1059 = vmatpush.msra.mxu0 0.0
        %1060 = vmatpush.msra.mxu0 0.0
        %1061 = vmatpush.msra.mxu0 0.0
        %1062 = vmatpush.msra.mxu0 0.0
        %1063 = vmatpush.msra.mxu0 0.0
        %1064 = vmatpush.msra.mxu0 0.0
        %1065 = vmatpush.msra.mxu0 0.0
        %1066 = vmatpush.msra.mxu0 %v971
        %1067 = vmatpush.msra.mxu0 %v970
        %1068 = vmatmul.f32.gmra.mxu0 %v1005
        %v1069 = vpop.f32.mrf.mxu0
        %v1070 = vadd.f32 0.0, %v1069
        %1071 = vmatmul.f32.gmra.mxu0 %v1008
        %v1072 = vpop.f32.mrf.mxu0
        %v1073 = vadd.f32 0.0, %v1072
        %1074 = vmatmul.f32.gmra.mxu0 %v1011
        %v1075 = vpop.f32.mrf.mxu0
        %v1076 = vadd.f32 0.0, %v1075
        %1077 = vmatmul.f32.gmra.mxu0 %v1014
        %v1078 = vpop.f32.mrf.mxu0
        %v1079 = vadd.f32 0.0, %v1078
        %1080 = vmatmul.f32.gmra.mxu0 %v1017
        %v1081 = vpop.f32.mrf.mxu0
        %v1082 = vadd.f32 0.0, %v1081
        %1083 = vmatmul.f32.gmra.mxu0 %v1020
        %v1084 = vpop.f32.mrf.mxu0
        %v1085 = vadd.f32 0.0, %v1084
        %1086 = vmatmul.f32.gmra.mxu0 %v1023
        %v1087 = vpop.f32.mrf.mxu0
        %v1088 = vadd.f32 0.0, %v1087
        %1089 = vmatmul.f32.gmra.mxu0 %v1026
        %v1090 = vpop.f32.mrf.mxu0
        %v1091 = vadd.f32 0.0, %v1090
        %1092 = vmatmul.f32.gmra.mxu0 %v1029
        %v1093 = vpop.f32.mrf.mxu0
        %v1094 = vadd.f32 0.0, %v1093
        %1095 = vmatmul.f32.gmra.mxu0 %v1032
        %v1096 = vpop.f32.mrf.mxu0
        %v1097 = vadd.f32 0.0, %v1096
        %1098 = vmatmul.f32.gmra.mxu0 %v1035
        %v1099 = vpop.f32.mrf.mxu0
        %v1100 = vadd.f32 0.0, %v1099
        %1101 = vmatmul.f32.gmra.mxu0 %v1038
        %v1102 = vpop.f32.mrf.mxu0
        %v1103 = vadd.f32 0.0, %v1102
        %1104 = vmatmul.f32.gmra.mxu0 %v1041
        %v1105 = vpop.f32.mrf.mxu0
        %v1106 = vadd.f32 0.0, %v1105
        %1107 = vmatmul.f32.gmra.mxu0 %v1044
        %v1108 = vpop.f32.mrf.mxu0
        %v1109 = vadd.f32 0.0, %v1108
        %1110 = vmatmul.f32.gmra.mxu0 %v1047
        %v1111 = vpop.f32.mrf.mxu0
        %v1112 = vadd.f32 0.0, %v1111
        %1113 = vmatmul.f32.gmra.mxu0 %v1050
        %v1114 = vpop.f32.mrf.mxu0
        %v1115 = vadd.f32 0.0, %v1114
        %1116 = vdwg.mxu0
        %v1117 = vld [vmem:[#allocation11] sm:$0xff]
        %v1118 = vld [vmem:[#allocation11 + $0x8] sm:$0xff]
        %v1119 = vld [vmem:[#allocation11 + $0x10] sm:$0xff]
        %v1120 = vld [vmem:[%s6] sm:$0xff]
        %v1121 = vld [vmem:[%s6 + $0x8] sm:$0xff]
        %v1122 = vld [vmem:[#allocation12] sm:$0xff]
        %v1123 = vld [vmem:[#allocation14] sm:$0xff]
        %v1124 = vld [vmem:[#allocation14 + $0x8] sm:$0xff]
        %v1125 = vld [vmem:[#allocation14 + $0x10] sm:$0xff]
        %v1126 = vld [vmem:[#allocation24] sm:$0xff]
        %1127 = vmatpush.msra.mxu0 %v1115
        %1128 = vmatpush.msra.mxu0 %v1112
        %1129 = vmatpush.msra.mxu0 %v1109
        %1130 = vmatpush.msra.mxu0 %v1106
        %1131 = vmatpush.msra.mxu0 %v1103
        %1132 = vmatpush.msra.mxu0 %v1100
        %1133 = vmatpush.msra.mxu0 %v1097
        %1134 = vmatpush.msra.mxu0 %v1094
        %1135 = vmatpush.msra.mxu0 %v1091
        %1136 = vmatpush.msra.mxu0 %v1088
        %1137 = vmatpush.msra.mxu0 %v1085
        %1138 = vmatpush.msra.mxu0 %v1082
        %1139 = vmatpush.msra.mxu0 %v1079
        %1140 = vmatpush.msra.mxu0 %v1076
        %1141 = vmatpush.msra.mxu0 %v1073
        %1142 = vmatpush.msra.mxu0 %v1070
        %1143 = vmatmul.f32.gmra.mxu0 %v1117
        %v1144 = vpop.f32.mrf.mxu0
        %v1145 = vadd.f32 0.0, %v1144
        %1146 = vmatmul.f32.gmra.mxu0 %v1118
        %v1147 = vpop.f32.mrf.mxu0
        %v1148 = vadd.f32 0.0, %v1147
        %1149 = vmatmul.f32.gmra.mxu0 %v1119
        %v1150 = vpop.f32.mrf.mxu0
        %v1151 = vadd.f32 0.0, %v1150
        %1152 = vdwg.mxu0
        %vm1153 = vcmask 64512
        %v1155 = vsel %vm1153, %v1120, 0
        %v1158 = vsel %vm1153, %v1121, 0
        %1160 = vmatpush.msra.mxu0 0.0
        %1161 = vmatpush.msra.mxu0 0.0
        %1162 = vmatpush.msra.mxu0 0.0
        %1163 = vmatpush.msra.mxu0 0.0
        %1164 = vmatpush.msra.mxu0 0.0
        %1165 = vmatpush.msra.mxu0 0.0
        %1166 = vmatpush.msra.mxu0 0.0
        %1167 = vmatpush.msra.mxu0 0.0
        %1168 = vmatpush.msra.mxu0 0.0
        %1169 = vmatpush.msra.mxu0 0.0
        %1170 = vmatpush.msra.mxu0 0.0
        %1171 = vmatpush.msra.mxu0 0.0
        %1172 = vmatpush.msra.mxu0 0.0
        %1173 = vmatpush.msra.mxu0 0.0
        %1174 = vmatpush.msra.mxu0 0.0
        %1175 = vmatpush.msra.mxu0 %v1126
        %1176 = vmatmul.f32.gmra.mxu0 %v1155
        %v1177 = vpop.f32.mrf.mxu0
        %v1178 = vadd.f32 0.0, %v1177
        %1179 = vmatmul.f32.gmra.mxu0 %v1158
        %v1180 = vpop.f32.mrf.mxu0
        %v1181 = vadd.f32 0.0, %v1180
        %1182 = vdwg.mxu0
        %v1183 = vadd.f32 %v1145, %v1178
        %v1184 = vadd.f32 %v1183, %v1123
        %v1185 = vsub.f32 0.0, %v1184
        %v1186 = vmul.f32 %v1185, 1.442695
        %v1187 = vpow.pop %v1186
        %v1188 = vadd.f32 %v1187, 1.0
        %v1189 = vrcp.pop %v1188
        %v1190 = vmul.f32 %v1188, %v1189
        %v1191 = vsub.f32 1.0, %v1190
        %v1192 = vmul.f32 %v1189, %v1191
        %v1193 = vadd.f32 %v1189, %v1192
        %vm1194 = vweird.f32 %v1188
        %vm1195 = vweird.f32 %v1189
        %vm1196 = vmor %vm1194, %vm1195
        %v1197 = vsel %vm1196, %v1189, %v1193
        %v1198 = vand.u32 2147483647, %v1188
        %vm1199 = vcmp.eq.f32.partialorder %v1198, 8.507059e+37
        %v1200 = vand.u32 %v1188, 2147483648
        %v1201 = vor.u32 1.1754944e-38, %v1200
        %v1202 = vsel %vm1199, %v1201, %v1197
        %v1203 = vmul.f32 1.0, %v1202
        %v1204 = vadd.f32 %v1148, %v1181
        %v1205 = vadd.f32 %v1204, %v1124
        %v1206 = vsub.f32 0.0, %v1205
        %v1207 = vmul.f32 %v1206, 1.442695
        %v1208 = vpow.pop %v1207
        %v1209 = vadd.f32 %v1208, 1.0
        %v1210 = vrcp.pop %v1209
        %v1211 = vmul.f32 %v1209, %v1210
        %v1212 = vsub.f32 1.0, %v1211
        %v1213 = vmul.f32 %v1210, %v1212
        %v1214 = vadd.f32 %v1210, %v1213
        %vm1215 = vweird.f32 %v1209
        %vm1216 = vweird.f32 %v1210
        %vm1217 = vmor %vm1215, %vm1216
        %v1218 = vsel %vm1217, %v1210, %v1214
        %v1219 = vand.u32 2147483647, %v1209
        %vm1220 = vcmp.eq.f32.partialorder %v1219, 8.507059e+37
        %v1221 = vand.u32 %v1209, 2147483648
        %v1222 = vor.u32 1.1754944e-38, %v1221
        %v1223 = vsel %vm1220, %v1222, %v1218
        %v1224 = vmul.f32 1.0, %v1223
        %v1225 = vmul.f32 %v1224, %v1126
        %v1227 = vsel %vm1153, %v1122, 0
        %1229 = vmatpush.msra.mxu0 0.0
        %1230 = vmatpush.msra.mxu0 0.0
        %1231 = vmatpush.msra.mxu0 0.0
        %1232 = vmatpush.msra.mxu0 0.0
        %1233 = vmatpush.msra.mxu0 0.0
        %1234 = vmatpush.msra.mxu0 0.0
        %1235 = vmatpush.msra.mxu0 0.0
        %1236 = vmatpush.msra.mxu0 0.0
        %1237 = vmatpush.msra.mxu0 0.0
        %1238 = vmatpush.msra.mxu0 0.0
        %1239 = vmatpush.msra.mxu0 0.0
        %1240 = vmatpush.msra.mxu0 0.0
        %1241 = vmatpush.msra.mxu0 0.0
        %1242 = vmatpush.msra.mxu0 0.0
        %1243 = vmatpush.msra.mxu0 0.0
        %1244 = vmatpush.msra.mxu0 %v1225
        %1245 = vmatmul.f32.gmra.mxu0 %v1227
        %v1246 = vpop.f32.mrf.mxu0
        %v1247 = vadd.f32 0.0, %v1246
        %1248 = vdwg.mxu0
        %v1249 = vadd.f32 %v1151, %v1247
        %v1250 = vadd.f32 %v1249, %v1125
        %v1251 = vtanh.pop %v1250
        %v1252 = vsub.f32 1.0, %v1203
        %v1253 = vmul.f32 %v1252, %v1126
        %v1254 = vmul.f32 %v1203, %v1251
        %v1255 = vadd.f32 %v1253, %v1254
        %1256 = vst [vmem:[#allocation24] sm:$0xff] %v1255
        %v1257 = vld [vmem:[#allocation24] sm:$0xff]
        %v1258 = vld [vmem:[#allocation24 + $0x8] sm:$0xff]
        %v1259 = vld [vmem:[#allocation24 + $0x10] sm:$0xff]
        %v1260 = vld [vmem:[#allocation24 + $0x18] sm:$0xff]
        %v1261 = vld [vmem:[#allocation24 + $0x20] sm:$0xff]
        %v1262 = vld [vmem:[#allocation24 + $0x28] sm:$0xff]
        %v1263 = vld [vmem:[#allocation24 + $0x30] sm:$0xff]
        %v1264 = vld [vmem:[#allocation24 + $0x38] sm:$0xff]
        %v1265 = vld [vmem:[#allocation24 + $0x40] sm:$0xff]
        %v1266 = vld [vmem:[#allocation24 + $0x48] sm:$0xff]
        %v1267 = vld [vmem:[#allocation24 + $0x50] sm:$0xff]
        %v1268 = vld [vmem:[#allocation24 + $0x58] sm:$0xff]
        %v1269 = vld [vmem:[#allocation24 + $0x60] sm:$0xff]
        %v1270 = vld [vmem:[#allocation24 + $0x68] sm:$0xff]
        %v1271 = vld [vmem:[#allocation24 + $0x70] sm:$0xff]
        %v1272 = vld [vmem:[#allocation24 + $0x78] sm:$0xff]
        %v1274 = vsel %vm957, %v903, 0
        %v1277 = vsel %vm957, %v904, 0
        %1279 = vmatpush.msra.mxu0 0.0
        %1280 = vmatpush.msra.mxu0 0.0
        %1281 = vmatpush.msra.mxu0 0.0
        %1282 = vmatpush.msra.mxu0 0.0
        %1283 = vmatpush.msra.mxu0 0.0
        %1284 = vmatpush.msra.mxu0 0.0
        %1285 = vmatpush.msra.mxu0 0.0
        %1286 = vmatpush.msra.mxu0 0.0
        %1287 = vmatpush.msra.mxu0 0.0
        %1288 = vmatpush.msra.mxu0 0.0
        %1289 = vmatpush.msra.mxu0 0.0
        %1290 = vmatpush.msra.mxu0 0.0
        %1291 = vmatpush.msra.mxu0 0.0
        %1292 = vmatpush.msra.mxu0 0.0
        %1293 = vmatpush.msra.mxu0 %v906
        %1294 = vmatpush.msra.mxu0 %v905
        %1295 = vmatmul.f32.gmra.mxu0 %v1274
        %v1296 = vpop.f32.mrf.mxu0
        %v1297 = vadd.f32 0.0, %v1296
        %1298 = vmatmul.f32.gmra.mxu0 %v1277
        %v1299 = vpop.f32.mrf.mxu0
        %v1300 = vadd.f32 0.0, %v1299
        %1301 = vdwg.mxu0
        %1302 = vmatpush.msra.mxu0 %v1272
        %1303 = vmatpush.msra.mxu0 %v1271
        %1304 = vmatpush.msra.mxu0 %v1270
        %1305 = vmatpush.msra.mxu0 %v1269
        %1306 = vmatpush.msra.mxu0 %v1268
        %1307 = vmatpush.msra.mxu0 %v1267
        %1308 = vmatpush.msra.mxu0 %v1266
        %1309 = vmatpush.msra.mxu0 %v1265
        %1310 = vmatpush.msra.mxu0 %v1264
        %1311 = vmatpush.msra.mxu0 %v1263
        %1312 = vmatpush.msra.mxu0 %v1262
        %1313 = vmatpush.msra.mxu0 %v1261
        %1314 = vmatpush.msra.mxu0 %v1260
        %1315 = vmatpush.msra.mxu0 %v1259
        %1316 = vmatpush.msra.mxu0 %v1258
        %1317 = vmatpush.msra.mxu0 %v1257
        %1318 = vmatmul.f32.gmra.mxu0 %v1297
        %v1319 = vpop.f32.mrf.mxu0
        %v1320 = vadd.f32 0.0, %v1319
        %1321 = vmatmul.f32.gmra.mxu0 %v1300
        %v1322 = vpop.f32.mrf.mxu0
        %v1323 = vadd.f32 0.0, %v1322
        %1324 = vdwg.mxu0
        %v1325 = vmax.f32 %v1320, 0.0
        %v1326 = vmax.f32 %v1323, 0.0
        %v1327 = vld [vmem:[#allocation15] sm:$0x1]
        %v1329 = vperm.slane %v1327, 0
        %v1331 = vmul.f32 %v1325, %v1329
        %v1332 = vmul.f32 %v1326, %v1329
        %1333 = vadd.xlane.f32.xlu0 %v1331
        %v1334 = vpop.xlane.xlu0 %1333
        %1335 = vadd.xlane.f32.xlu0 %v1332
        %v1336 = vpop.xlane.xlu0 %1335
        %1337 = vmatpush.xpose.msra.mxu0 0.0
        %1338 = vmatpush.xpose.msra.mxu0 0.0
        %1339 = vmatpush.xpose.msra.mxu0 0.0
        %1340 = vmatpush.xpose.msra.mxu0 0.0
        %1341 = vmatpush.xpose.msra.mxu0 0.0
        %1342 = vmatpush.xpose.msra.mxu0 0.0
        %1343 = vmatpush.xpose.msra.mxu0 0.0
        %1344 = vmatpush.xpose.msra.mxu0 0.0
        %1345 = vmatpush.xpose.msra.mxu0 0.0
        %1346 = vmatpush.xpose.msra.mxu0 0.0
        %1347 = vmatpush.xpose.msra.mxu0 0.0
        %1348 = vmatpush.xpose.msra.mxu0 0.0
        %1349 = vmatpush.xpose.msra.mxu0 0.0
        %1350 = vmatpush.xpose.msra.mxu0 0.0
        %1351 = vmatpush.xpose.msra.mxu0 %v1326
        %1352 = vmatpush.xpose.msra.mxu0 %v1325
        %1353 = vmatmul.f32.gmra.mxu0 %v1327
        %v1354 = vpop.f32.mrf.mxu0
        %v1355 = vadd.f32 0.0, %v1354
        %1356 = vdwg.mxu0
        %v1357 = vperm.slane %v1355, 0
        %vm1358 = vcmp.gt.f32.partialorder %v1357, %v1334
        %vm1359 = vcmp.gt.f32.partialorder %v1357, %v1336
        %vm1360 = vcmp.eq.f32.partialorder %v1357, %v1334
        %vm1361 = vcmp.eq.f32.partialorder %v1357, %v1336
        %vm1362 = vmand %vm1360, %vm947
        %vm1363 = vmand %vm1361, %vm948
        %vm1364 = vmor %vm1358, %vm1362
        %vm1365 = vmor %vm1359, %vm1363
        %v1366 = vsel %vm1364, 1, 0
        %v1367 = vsel %vm1365, 1, 0
        %v1368 = vcvt.s32.f32 %v1366
        %v1369 = vcvt.s32.f32 %v1367
        %v1370 = vsel %vm957, %v1368, 0.0
        %1371 = vadd.xlane.f32.xlu0 %v1370
        %v1372 = vpop.xlane.xlu0 %1371
        %v1373 = vsel %vm957, %v1369, 0.0
        %1374 = vadd.xlane.f32.xlu0 %v1373
        %v1375 = vpop.xlane.xlu0 %1374
        %vm1376 = vcmp.eq.f32.partialorder %v964, %v1372
        %vm1377 = vcmp.eq.f32.partialorder %v964, %v1375
        %vm1378 = vmand %vm1376, %vm967
        %vm1379 = vmand %vm1377, %vm967
        %v1380 = vsel %vm1378, %v1334, 0.0
        %v1381 = vsel %vm1379, %v1336, 0.0
        %1382 = vxpose.xlu0.b32.start [1/16] %v1325, 128
        %1383 = vxpose.xlu0.b32.cont [2/16] %v1326, 128
        %1384 = vxpose.xlu0.b32.cont [3/16] 0.0, 128
        %1385 = vxpose.xlu0.b32.cont [4/16] 0.0, 128
        %1386 = vxpose.xlu0.b32.cont [5/16] 0.0, 128
        %1387 = vxpose.xlu0.b32.cont [6/16] 0.0, 128
        %1388 = vxpose.xlu0.b32.cont [7/16] 0.0, 128
        %1389 = vxpose.xlu0.b32.cont [8/16] 0.0, 128
        %1390 = vxpose.xlu0.b32.cont [9/16] 0.0, 128
        %1391 = vxpose.xlu0.b32.cont [10/16] 0.0, 128
        %1392 = vxpose.xlu0.b32.cont [11/16] 0.0, 128
        %1393 = vxpose.xlu0.b32.cont [12/16] 0.0, 128
        %1394 = vxpose.xlu0.b32.cont [13/16] 0.0, 128
        %1395 = vxpose.xlu0.b32.cont [14/16] 0.0, 128
        %1396 = vxpose.xlu0.b32.cont [15/16] 0.0, 128
        %1397 = vxpose.xlu0.b32.end [16/16] 0.0, 128
        %v1398 = vpop.trf.xlu0
        %v1399 = vpop.trf.xlu0
        %v1400 = vpop.trf.xlu0
        %v1401 = vpop.trf.xlu0
        %v1402 = vpop.trf.xlu0
        %v1403 = vpop.trf.xlu0
        %v1404 = vpop.trf.xlu0
        %v1405 = vpop.trf.xlu0
        %v1406 = vpop.trf.xlu0
        %v1407 = vpop.trf.xlu0
        %v1408 = vpop.trf.xlu0
        %v1409 = vpop.trf.xlu0
        %v1410 = vpop.trf.xlu0
        %v1411 = vpop.trf.xlu0
        %v1412 = vpop.trf.xlu0
        %v1413 = vpop.trf.xlu0
        %v1415 = vsel %vm957, %v1398, 0
        %v1418 = vsel %vm957, %v1399, 0
        %v1421 = vsel %vm957, %v1400, 0
        %v1424 = vsel %vm957, %v1401, 0
        %v1427 = vsel %vm957, %v1402, 0
        %v1430 = vsel %vm957, %v1403, 0
        %v1433 = vsel %vm957, %v1404, 0
        %v1436 = vsel %vm957, %v1405, 0
        %v1439 = vsel %vm957, %v1406, 0
        %v1442 = vsel %vm957, %v1407, 0
        %v1445 = vsel %vm957, %v1408, 0
        %v1448 = vsel %vm957, %v1409, 0
        %v1451 = vsel %vm957, %v1410, 0
        %v1454 = vsel %vm957, %v1411, 0
        %v1457 = vsel %vm957, %v1412, 0
        %v1460 = vsel %vm957, %v1413, 0
        %1462 = vmatpush.msra.mxu0 0.0
        %1463 = vmatpush.msra.mxu0 0.0
        %1464 = vmatpush.msra.mxu0 0.0
        %1465 = vmatpush.msra.mxu0 0.0
        %1466 = vmatpush.msra.mxu0 0.0
        %1467 = vmatpush.msra.mxu0 0.0
        %1468 = vmatpush.msra.mxu0 0.0
        %1469 = vmatpush.msra.mxu0 0.0
        %1470 = vmatpush.msra.mxu0 0.0
        %1471 = vmatpush.msra.mxu0 0.0
        %1472 = vmatpush.msra.mxu0 0.0
        %1473 = vmatpush.msra.mxu0 0.0
        %1474 = vmatpush.msra.mxu0 0.0
        %1475 = vmatpush.msra.mxu0 0.0
        %1476 = vmatpush.msra.mxu0 %v1381
        %1477 = vmatpush.msra.mxu0 %v1380
        %1478 = vmatmul.f32.gmra.mxu0 %v1415
        %v1479 = vpop.f32.mrf.mxu0
        %v1480 = vadd.f32 0.0, %v1479
        %1481 = vmatmul.f32.gmra.mxu0 %v1418
        %v1482 = vpop.f32.mrf.mxu0
        %v1483 = vadd.f32 0.0, %v1482
        %1484 = vmatmul.f32.gmra.mxu0 %v1421
        %v1485 = vpop.f32.mrf.mxu0
        %v1486 = vadd.f32 0.0, %v1485
        %1487 = vmatmul.f32.gmra.mxu0 %v1424
        %v1488 = vpop.f32.mrf.mxu0
        %v1489 = vadd.f32 0.0, %v1488
        %1490 = vmatmul.f32.gmra.mxu0 %v1427
        %v1491 = vpop.f32.mrf.mxu0
        %v1492 = vadd.f32 0.0, %v1491
        %1493 = vmatmul.f32.gmra.mxu0 %v1430
        %v1494 = vpop.f32.mrf.mxu0
        %v1495 = vadd.f32 0.0, %v1494
        %1496 = vmatmul.f32.gmra.mxu0 %v1433
        %v1497 = vpop.f32.mrf.mxu0
        %v1498 = vadd.f32 0.0, %v1497
        %1499 = vmatmul.f32.gmra.mxu0 %v1436
        %v1500 = vpop.f32.mrf.mxu0
        %v1501 = vadd.f32 0.0, %v1500
        %1502 = vmatmul.f32.gmra.mxu0 %v1439
        %v1503 = vpop.f32.mrf.mxu0
        %v1504 = vadd.f32 0.0, %v1503
        %1505 = vmatmul.f32.gmra.mxu0 %v1442
        %v1506 = vpop.f32.mrf.mxu0
        %v1507 = vadd.f32 0.0, %v1506
        %1508 = vmatmul.f32.gmra.mxu0 %v1445
        %v1509 = vpop.f32.mrf.mxu0
        %v1510 = vadd.f32 0.0, %v1509
        %1511 = vmatmul.f32.gmra.mxu0 %v1448
        %v1512 = vpop.f32.mrf.mxu0
        %v1513 = vadd.f32 0.0, %v1512
        %1514 = vmatmul.f32.gmra.mxu0 %v1451
        %v1515 = vpop.f32.mrf.mxu0
        %v1516 = vadd.f32 0.0, %v1515
        %1517 = vmatmul.f32.gmra.mxu0 %v1454
        %v1518 = vpop.f32.mrf.mxu0
        %v1519 = vadd.f32 0.0, %v1518
        %1520 = vmatmul.f32.gmra.mxu0 %v1457
        %v1521 = vpop.f32.mrf.mxu0
        %v1522 = vadd.f32 0.0, %v1521
        %1523 = vmatmul.f32.gmra.mxu0 %v1460
        %v1524 = vpop.f32.mrf.mxu0
        %v1525 = vadd.f32 0.0, %v1524
        %1526 = vdwg.mxu0
        %v1527 = vld [vmem:[#allocation17] sm:$0xff]
        %v1528 = vld [vmem:[#allocation17 + $0x8] sm:$0xff]
        %v1529 = vld [vmem:[#allocation17 + $0x10] sm:$0xff]
        %v1530 = vld [vmem:[%s11] sm:$0xff]
        %v1531 = vld [vmem:[%s11 + $0x8] sm:$0xff]
        %v1532 = vld [vmem:[#allocation18] sm:$0xff]
        %v1533 = vld [vmem:[#allocation20] sm:$0xff]
        %v1534 = vld [vmem:[#allocation20 + $0x8] sm:$0xff]
        %v1535 = vld [vmem:[#allocation20 + $0x10] sm:$0xff]
        %v1536 = vld [vmem:[#allocation26] sm:$0xff]
        %1537 = vmatpush.msra.mxu0 %v1525
        %1538 = vmatpush.msra.mxu0 %v1522
        %1539 = vmatpush.msra.mxu0 %v1519
        %1540 = vmatpush.msra.mxu0 %v1516
        %1541 = vmatpush.msra.mxu0 %v1513
        %1542 = vmatpush.msra.mxu0 %v1510
        %1543 = vmatpush.msra.mxu0 %v1507
        %1544 = vmatpush.msra.mxu0 %v1504
        %1545 = vmatpush.msra.mxu0 %v1501
        %1546 = vmatpush.msra.mxu0 %v1498
        %1547 = vmatpush.msra.mxu0 %v1495
        %1548 = vmatpush.msra.mxu0 %v1492
        %1549 = vmatpush.msra.mxu0 %v1489
        %1550 = vmatpush.msra.mxu0 %v1486
        %1551 = vmatpush.msra.mxu0 %v1483
        %1552 = vmatpush.msra.mxu0 %v1480
        %1553 = vmatmul.f32.gmra.mxu0 %v1527
        %v1554 = vpop.f32.mrf.mxu0
        %v1555 = vadd.f32 0.0, %v1554
        %1556 = vmatmul.f32.gmra.mxu0 %v1528
        %v1557 = vpop.f32.mrf.mxu0
        %v1558 = vadd.f32 0.0, %v1557
        %1559 = vmatmul.f32.gmra.mxu0 %v1529
        %v1560 = vpop.f32.mrf.mxu0
        %v1561 = vadd.f32 0.0, %v1560
        %1562 = vdwg.mxu0
        %v1564 = vsel %vm1153, %v1530, 0
        %v1567 = vsel %vm1153, %v1531, 0
        %1569 = vmatpush.msra.mxu0 0.0
        %1570 = vmatpush.msra.mxu0 0.0
        %1571 = vmatpush.msra.mxu0 0.0
        %1572 = vmatpush.msra.mxu0 0.0
        %1573 = vmatpush.msra.mxu0 0.0
        %1574 = vmatpush.msra.mxu0 0.0
        %1575 = vmatpush.msra.mxu0 0.0
        %1576 = vmatpush.msra.mxu0 0.0
        %1577 = vmatpush.msra.mxu0 0.0
        %1578 = vmatpush.msra.mxu0 0.0
        %1579 = vmatpush.msra.mxu0 0.0
        %1580 = vmatpush.msra.mxu0 0.0
        %1581 = vmatpush.msra.mxu0 0.0
        %1582 = vmatpush.msra.mxu0 0.0
        %1583 = vmatpush.msra.mxu0 0.0
        %1584 = vmatpush.msra.mxu0 %v1536
        %1585 = vmatmul.f32.gmra.mxu0 %v1564
        %v1586 = vpop.f32.mrf.mxu0
        %v1587 = vadd.f32 0.0, %v1586
        %1588 = vmatmul.f32.gmra.mxu0 %v1567
        %v1589 = vpop.f32.mrf.mxu0
        %v1590 = vadd.f32 0.0, %v1589
        %1591 = vdwg.mxu0
        %v1592 = vadd.f32 %v1555, %v1587
        %v1593 = vadd.f32 %v1592, %v1533
        %v1594 = vsub.f32 0.0, %v1593
        %v1595 = vmul.f32 %v1594, 1.442695
        %v1596 = vpow.pop %v1595
        %v1597 = vadd.f32 %v1596, 1.0
        %v1598 = vrcp.pop %v1597
        %v1599 = vmul.f32 %v1597, %v1598
        %v1600 = vsub.f32 1.0, %v1599
        %v1601 = vmul.f32 %v1598, %v1600
        %v1602 = vadd.f32 %v1598, %v1601
        %vm1603 = vweird.f32 %v1597
        %vm1604 = vweird.f32 %v1598
        %vm1605 = vmor %vm1603, %vm1604
        %v1606 = vsel %vm1605, %v1598, %v1602
        %v1607 = vand.u32 2147483647, %v1597
        %vm1608 = vcmp.eq.f32.partialorder %v1607, 8.507059e+37
        %v1609 = vand.u32 %v1597, 2147483648
        %v1610 = vor.u32 1.1754944e-38, %v1609
        %v1611 = vsel %vm1608, %v1610, %v1606
        %v1612 = vmul.f32 1.0, %v1611
        %v1613 = vadd.f32 %v1558, %v1590
        %v1614 = vadd.f32 %v1613, %v1534
        %v1615 = vsub.f32 0.0, %v1614
        %v1616 = vmul.f32 %v1615, 1.442695
        %v1617 = vpow.pop %v1616
        %v1618 = vadd.f32 %v1617, 1.0
        %v1619 = vrcp.pop %v1618
        %v1620 = vmul.f32 %v1618, %v1619
        %v1621 = vsub.f32 1.0, %v1620
        %v1622 = vmul.f32 %v1619, %v1621
        %v1623 = vadd.f32 %v1619, %v1622
        %vm1624 = vweird.f32 %v1618
        %vm1625 = vweird.f32 %v1619
        %vm1626 = vmor %vm1624, %vm1625
        %v1627 = vsel %vm1626, %v1619, %v1623
        %v1628 = vand.u32 2147483647, %v1618
        %vm1629 = vcmp.eq.f32.partialorder %v1628, 8.507059e+37
        %v1630 = vand.u32 %v1618, 2147483648
        %v1631 = vor.u32 1.1754944e-38, %v1630
        %v1632 = vsel %vm1629, %v1631, %v1627
        %v1633 = vmul.f32 1.0, %v1632
        %v1634 = vmul.f32 %v1633, %v1536
        %v1636 = vsel %vm1153, %v1532, 0
        %1638 = vmatpush.msra.mxu0 0.0
        %1639 = vmatpush.msra.mxu0 0.0
        %1640 = vmatpush.msra.mxu0 0.0
        %1641 = vmatpush.msra.mxu0 0.0
        %1642 = vmatpush.msra.mxu0 0.0
        %1643 = vmatpush.msra.mxu0 0.0
        %1644 = vmatpush.msra.mxu0 0.0
        %1645 = vmatpush.msra.mxu0 0.0
        %1646 = vmatpush.msra.mxu0 0.0
        %1647 = vmatpush.msra.mxu0 0.0
        %1648 = vmatpush.msra.mxu0 0.0
        %1649 = vmatpush.msra.mxu0 0.0
        %1650 = vmatpush.msra.mxu0 0.0
        %1651 = vmatpush.msra.mxu0 0.0
        %1652 = vmatpush.msra.mxu0 0.0
        %1653 = vmatpush.msra.mxu0 %v1634
        %1654 = vmatmul.f32.gmra.mxu0 %v1636
        %v1655 = vpop.f32.mrf.mxu0
        %v1656 = vadd.f32 0.0, %v1655
        %1657 = vdwg.mxu0
        %v1658 = vadd.f32 %v1561, %v1656
        %v1659 = vadd.f32 %v1658, %v1535
        %v1660 = vtanh.pop %v1659
        %v1661 = vsub.f32 1.0, %v1612
        %v1662 = vmul.f32 %v1661, %v1536
        %v1663 = vmul.f32 %v1612, %v1660
        %v1664 = vadd.f32 %v1662, %v1663
        %1665 = vst [vmem:[#allocation26] sm:$0xff] %v1664
        %v1666 = vld [vmem:[#allocation26] sm:$0xff]
        %v1667 = vld [vmem:[#allocation26 + $0x8] sm:$0xff]
        %v1668 = vld [vmem:[#allocation26 + $0x10] sm:$0xff]
        %v1669 = vld [vmem:[#allocation26 + $0x18] sm:$0xff]
        %v1670 = vld [vmem:[#allocation26 + $0x20] sm:$0xff]
        %v1671 = vld [vmem:[#allocation26 + $0x28] sm:$0xff]
        %v1672 = vld [vmem:[#allocation26 + $0x30] sm:$0xff]
        %v1673 = vld [vmem:[#allocation26 + $0x38] sm:$0xff]
        %v1674 = vld [vmem:[#allocation26 + $0x40] sm:$0xff]
        %v1675 = vld [vmem:[#allocation26 + $0x48] sm:$0xff]
        %v1676 = vld [vmem:[#allocation26 + $0x50] sm:$0xff]
        %v1677 = vld [vmem:[#allocation26 + $0x58] sm:$0xff]
        %v1678 = vld [vmem:[#allocation26 + $0x60] sm:$0xff]
        %v1679 = vld [vmem:[#allocation26 + $0x68] sm:$0xff]
        %v1680 = vld [vmem:[#allocation26 + $0x70] sm:$0xff]
        %v1681 = vld [vmem:[#allocation26 + $0x78] sm:$0xff]
        %1682 = vmatpush.msra.mxu0 0.0
        %1683 = vmatpush.msra.mxu0 0.0
        %1684 = vmatpush.msra.mxu0 0.0
        %1685 = vmatpush.msra.mxu0 0.0
        %1686 = vmatpush.msra.mxu0 0.0
        %1687 = vmatpush.msra.mxu0 0.0
        %1688 = vmatpush.msra.mxu0 0.0
        %1689 = vmatpush.msra.mxu0 0.0
        %1690 = vmatpush.msra.mxu0 0.0
        %1691 = vmatpush.msra.mxu0 0.0
        %1692 = vmatpush.msra.mxu0 0.0
        %1693 = vmatpush.msra.mxu0 0.0
        %1694 = vmatpush.msra.mxu0 0.0
        %1695 = vmatpush.msra.mxu0 0.0
        %1696 = vmatpush.msra.mxu0 %v1326
        %1697 = vmatpush.msra.mxu0 %v1325
        %1698 = vmatmul.f32.gmra.mxu0 %v1274
        %v1699 = vpop.f32.mrf.mxu0
        %v1700 = vadd.f32 0.0, %v1699
        %1701 = vmatmul.f32.gmra.mxu0 %v1277
        %v1702 = vpop.f32.mrf.mxu0
        %v1703 = vadd.f32 0.0, %v1702
        %1704 = vdwg.mxu0
        %1705 = vmatpush.msra.mxu0 %v1681
        %1706 = vmatpush.msra.mxu0 %v1680
        %1707 = vmatpush.msra.mxu0 %v1679
        %1708 = vmatpush.msra.mxu0 %v1678
        %1709 = vmatpush.msra.mxu0 %v1677
        %1710 = vmatpush.msra.mxu0 %v1676
        %1711 = vmatpush.msra.mxu0 %v1675
        %1712 = vmatpush.msra.mxu0 %v1674
        %1713 = vmatpush.msra.mxu0 %v1673
        %1714 = vmatpush.msra.mxu0 %v1672
        %1715 = vmatpush.msra.mxu0 %v1671
        %1716 = vmatpush.msra.mxu0 %v1670
        %1717 = vmatpush.msra.mxu0 %v1669
        %1718 = vmatpush.msra.mxu0 %v1668
        %1719 = vmatpush.msra.mxu0 %v1667
        %1720 = vmatpush.msra.mxu0 %v1666
        %1721 = vmatmul.f32.gmra.mxu0 %v1700
        %v1722 = vpop.f32.mrf.mxu0
        %v1723 = vadd.f32 0.0, %v1722
        %1724 = vmatmul.f32.gmra.mxu0 %v1703
        %v1725 = vpop.f32.mrf.mxu0
        %v1726 = vadd.f32 0.0, %v1725
        %1727 = vdwg.mxu0
        %s1728 = smul.u32 %s45, 16
        %s1729 = scalar_lea.vmem [#allocation2], %s1728
        %1730 = vst [vmem:[%s1729] sm:$0xff] %v1723
        %1731 = vst [vmem:[%s1729 + $0x8] sm:$0xff] %v1726
        %p1732 = scmp.eq.s32.totalorder %s45, 3
        // Predicated region
        $region145: #{tpu_custom_call.1} parent=91 // pred_check
          %p1733 = pneg %p1732
        $region146: #{tpu_custom_call.1} parent=91 // pred_check_branch
          %1735 = sbr.rel (%p1733) target = $region148
        $region147: #{tpu_custom_call.1} parent=91 // pred_region
          %v1736 = vld [vmem:[#allocation2] sm:$0xff]
          %v1737 = vld [vmem:[#allocation2 + $0x8] sm:$0xff]
          %v1738 = vld [vmem:[#allocation2 + $0x10] sm:$0xff]
          %v1739 = vld [vmem:[#allocation2 + $0x18] sm:$0xff]
          %v1740 = vld [vmem:[#allocation2 + $0x20] sm:$0xff]
          %v1741 = vld [vmem:[#allocation2 + $0x28] sm:$0xff]
          %v1742 = vld [vmem:[#allocation2 + $0x30] sm:$0xff]
          %v1743 = vld [vmem:[#allocation2 + $0x38] sm:$0xff]
          %v1744 = vld [vmem:[%s14] sm:$0xff]
          %v1745 = vld [vmem:[%s14 + $0x8] sm:$0xff]
          %v1746 = vld [vmem:[%s14 + $0x10] sm:$0xff]
          %v1747 = vld [vmem:[%s14 + $0x18] sm:$0xff]
          %1748 = vset.pattern.permute.xlu0 0
          %1749 = vperm.xlu0 %1748, %v1744
          %v1750 = vpop.permute.xlu0 %1749
          %1751 = vset.pattern.permute.xlu0 0
          %1752 = vperm.xlu0 %1751, %v1745
          %v1753 = vpop.permute.xlu0 %1752
          %1754 = vset.pattern.permute.xlu0 0
          %1755 = vperm.xlu0 %1754, %v1746
          %v1756 = vpop.permute.xlu0 %1755
          %1757 = vset.pattern.permute.xlu0 0
          %1758 = vperm.xlu0 %1757, %v1747
          %v1759 = vpop.permute.xlu0 %1758
          %vm1760 = vcmp.eq.s32.totalorder %v941, %v1750
          %vm1761 = vcmp.eq.s32.totalorder %v941, %v1753
          %vm1762 = vcmp.eq.s32.totalorder %v941, %v1756
          %vm1763 = vcmp.eq.s32.totalorder %v941, %v1759
          %v1764 = vsel %vm1760, 1, 0
          %v1765 = vsel %vm1761, 1, 0
          %v1766 = vsel %vm1762, 1, 0
          %v1767 = vsel %vm1763, 1, 0
          %v1768 = vcvt.s32.f32 %v1764
          %v1769 = vcvt.s32.f32 %v1765
          %v1770 = vcvt.s32.f32 %v1766
          %v1771 = vcvt.s32.f32 %v1767
          %v1772 = vld [vmem:[%s15] sm:$0xff]
          %v1773 = vld [vmem:[%s15 + $0x8] sm:$0xff]
          %v1774 = vld [vmem:[%s15 + $0x10] sm:$0xff]
          %v1775 = vld [vmem:[%s15 + $0x18] sm:$0xff]
          %1776 = vset.pattern.permute.xlu0 0
          %1777 = vperm.xlu0 %1776, %v1772
          %v1778 = vpop.permute.xlu0 %1777
          %1779 = vset.pattern.permute.xlu0 0
          %1780 = vperm.xlu0 %1779, %v1773
          %v1781 = vpop.permute.xlu0 %1780
          %1782 = vset.pattern.permute.xlu0 0
          %1783 = vperm.xlu0 %1782, %v1774
          %v1784 = vpop.permute.xlu0 %1783
          %1785 = vset.pattern.permute.xlu0 0
          %1786 = vperm.xlu0 %1785, %v1775
          %v1787 = vpop.permute.xlu0 %1786
          %vm1788 = vcmp.eq.s32.totalorder %v941, %v1778
          %vm1789 = vcmp.eq.s32.totalorder %v941, %v1781
          %vm1790 = vcmp.eq.s32.totalorder %v941, %v1784
          %vm1791 = vcmp.eq.s32.totalorder %v941, %v1787
          %v1792 = vsel %vm1788, 1, 0
          %v1793 = vsel %vm1789, 1, 0
          %v1794 = vsel %vm1790, 1, 0
          %v1795 = vsel %vm1791, 1, 0
          %v1796 = vcvt.s32.f32 %v1792
          %v1797 = vcvt.s32.f32 %v1793
          %v1798 = vcvt.s32.f32 %v1794
          %v1799 = vcvt.s32.f32 %v1795
          %vm1800 = vcmask 523264
          %v1802 = vsel %vm1800, %v1768, 0
          %v1805 = vsel %vm1800, %v1769, 0
          %v1808 = vsel %vm1800, %v1770, 0
          %v1811 = vsel %vm1800, %v1771, 0
          %1813 = vmatpush.msra.mxu0 0.0
          %1814 = vmatpush.msra.mxu0 0.0
          %1815 = vmatpush.msra.mxu0 0.0
          %1816 = vmatpush.msra.mxu0 0.0
          %1817 = vmatpush.msra.mxu0 0.0
          %1818 = vmatpush.msra.mxu0 0.0
          %1819 = vmatpush.msra.mxu0 0.0
          %1820 = vmatpush.msra.mxu0 0.0
          %1821 = vmatpush.msra.mxu0 %v1743
          %1822 = vmatpush.msra.mxu0 %v1742
          %1823 = vmatpush.msra.mxu0 %v1741
          %1824 = vmatpush.msra.mxu0 %v1740
          %1825 = vmatpush.msra.mxu0 %v1739
          %1826 = vmatpush.msra.mxu0 %v1738
          %1827 = vmatpush.msra.mxu0 %v1737
          %1828 = vmatpush.msra.mxu0 %v1736
          %1829 = vmatmul.f32.gmra.mxu0 %v1802
          %v1830 = vpop.f32.mrf.mxu0
          %v1831 = vadd.f32 0.0, %v1830
          %1832 = vmatmul.f32.gmra.mxu0 %v1805
          %v1833 = vpop.f32.mrf.mxu0
          %v1834 = vadd.f32 0.0, %v1833
          %1835 = vmatmul.f32.gmra.mxu0 %v1808
          %v1836 = vpop.f32.mrf.mxu0
          %v1837 = vadd.f32 0.0, %v1836
          %1838 = vmatmul.f32.gmra.mxu0 %v1811
          %v1839 = vpop.f32.mrf.mxu0
          %v1840 = vadd.f32 0.0, %v1839
          %1841 = vdwg.mxu0
          %v1843 = vsel %vm1800, %v1796, 0
          %v1846 = vsel %vm1800, %v1797, 0
          %v1849 = vsel %vm1800, %v1798, 0
          %v1852 = vsel %vm1800, %v1799, 0
          %1854 = vmatpush.msra.mxu0 0.0
          %1855 = vmatpush.msra.mxu0 0.0
          %1856 = vmatpush.msra.mxu0 0.0
          %1857 = vmatpush.msra.mxu0 0.0
          %1858 = vmatpush.msra.mxu0 0.0
          %1859 = vmatpush.msra.mxu0 0.0
          %1860 = vmatpush.msra.mxu0 0.0
          %1861 = vmatpush.msra.mxu0 0.0
          %1862 = vmatpush.msra.mxu0 %v1743
          %1863 = vmatpush.msra.mxu0 %v1742
          %1864 = vmatpush.msra.mxu0 %v1741
          %1865 = vmatpush.msra.mxu0 %v1740
          %1866 = vmatpush.msra.mxu0 %v1739
          %1867 = vmatpush.msra.mxu0 %v1738
          %1868 = vmatpush.msra.mxu0 %v1737
          %1869 = vmatpush.msra.mxu0 %v1736
          %1870 = vmatmul.f32.gmra.mxu0 %v1843
          %v1871 = vpop.f32.mrf.mxu0
          %v1872 = vadd.f32 0.0, %v1871
          %1873 = vmatmul.f32.gmra.mxu0 %v1846
          %v1874 = vpop.f32.mrf.mxu0
          %v1875 = vadd.f32 0.0, %v1874
          %1876 = vmatmul.f32.gmra.mxu0 %v1849
          %v1877 = vpop.f32.mrf.mxu0
          %v1878 = vadd.f32 0.0, %v1877
          %1879 = vmatmul.f32.gmra.mxu0 %v1852
          %v1880 = vpop.f32.mrf.mxu0
          %v1881 = vadd.f32 0.0, %v1880
          %1882 = vdwg.mxu0
          %v1883 = vld [vmem:[%s16] sm:$0xff]
          %v1884 = vld [vmem:[%s16 + $0x8] sm:$0xff]
          %v1885 = vld [vmem:[%s16 + $0x10] sm:$0xff]
          %v1886 = vld [vmem:[%s16 + $0x18] sm:$0xff]
          %v1887 = vld [vmem:[%s16 + $0x20] sm:$0xff]
          %v1888 = vld [vmem:[%s16 + $0x28] sm:$0xff]
          %v1889 = vld [vmem:[%s16 + $0x30] sm:$0xff]
          %v1890 = vld [vmem:[%s16 + $0x38] sm:$0xff]
          %v1891 = vld [vmem:[%s16 + $0x40] sm:$0xff]
          %v1892 = vld [vmem:[%s16 + $0x48] sm:$0xff]
          %v1893 = vld [vmem:[%s16 + $0x50] sm:$0xff]
          %v1894 = vld [vmem:[%s16 + $0x58] sm:$0xff]
          %v1895 = vld [vmem:[%s16 + $0x60] sm:$0xff]
          %v1896 = vld [vmem:[%s16 + $0x68] sm:$0xff]
          %v1897 = vld [vmem:[%s16 + $0x70] sm:$0xff]
          %v1898 = vld [vmem:[%s16 + $0x78] sm:$0xff]
          %v1899 = vld [vmem:[#allocation21] sm:$0xff]
          %v1900 = vld [vmem:[#allocation21 + $0x8] sm:$0xff]
          %v1901 = vld [vmem:[#allocation21 + $0x10] sm:$0xff]
          %v1902 = vld [vmem:[#allocation21 + $0x18] sm:$0xff]
          %v1903 = vld [vmem:[#allocation21 + $0x20] sm:$0xff]
          %v1904 = vld [vmem:[#allocation21 + $0x28] sm:$0xff]
          %v1905 = vld [vmem:[#allocation21 + $0x30] sm:$0xff]
          %v1906 = vld [vmem:[#allocation21 + $0x38] sm:$0xff]
          %v1907 = vld [vmem:[#allocation21 + $0x40] sm:$0xff]
          %v1908 = vld [vmem:[#allocation21 + $0x48] sm:$0xff]
          %v1909 = vld [vmem:[#allocation21 + $0x50] sm:$0xff]
          %v1910 = vld [vmem:[#allocation21 + $0x58] sm:$0xff]
          %v1911 = vld [vmem:[#allocation21 + $0x60] sm:$0xff]
          %v1912 = vld [vmem:[#allocation21 + $0x68] sm:$0xff]
          %v1913 = vld [vmem:[#allocation21 + $0x70] sm:$0xff]
          %v1914 = vld [vmem:[#allocation21 + $0x78] sm:$0xff]
          %1915 = vmatpush.msra.mxu0 %v1914
          %1916 = vmatpush.msra.mxu0 %v1913
          %1917 = vmatpush.msra.mxu0 %v1912
          %1918 = vmatpush.msra.mxu0 %v1911
          %1919 = vmatpush.msra.mxu0 %v1910
          %1920 = vmatpush.msra.mxu0 %v1909
          %1921 = vmatpush.msra.mxu0 %v1908
          %1922 = vmatpush.msra.mxu0 %v1907
          %1923 = vmatpush.msra.mxu0 %v1906
          %1924 = vmatpush.msra.mxu0 %v1905
          %1925 = vmatpush.msra.mxu0 %v1904
          %1926 = vmatpush.msra.mxu0 %v1903
          %1927 = vmatpush.msra.mxu0 %v1902
          %1928 = vmatpush.msra.mxu0 %v1901
          %1929 = vmatpush.msra.mxu0 %v1900
          %1930 = vmatpush.msra.mxu0 %v1899
          %1931 = vmatmul.f32.gmra.mxu0 %v1872
          %v1932 = vpop.f32.mrf.mxu0
          %v1933 = vadd.f32 0.0, %v1932
          %1934 = vmatmul.f32.gmra.mxu0 %v1875
          %v1935 = vpop.f32.mrf.mxu0
          %v1936 = vadd.f32 0.0, %v1935
          %1937 = vmatmul.f32.gmra.mxu0 %v1878
          %v1938 = vpop.f32.mrf.mxu0
          %v1939 = vadd.f32 0.0, %v1938
          %1940 = vmatmul.f32.gmra.mxu0 %v1881
          %v1941 = vpop.f32.mrf.mxu0
          %v1942 = vadd.f32 0.0, %v1941
          %1943 = vdwg.mxu0
          %1944 = vmatpush.msra.mxu0 %v1898
          %1945 = vmatpush.msra.mxu0 %v1897
          %1946 = vmatpush.msra.mxu0 %v1896
          %1947 = vmatpush.msra.mxu0 %v1895
          %1948 = vmatpush.msra.mxu0 %v1894
          %1949 = vmatpush.msra.mxu0 %v1893
          %1950 = vmatpush.msra.mxu0 %v1892
          %1951 = vmatpush.msra.mxu0 %v1891
          %1952 = vmatpush.msra.mxu0 %v1890
          %1953 = vmatpush.msra.mxu0 %v1889
          %1954 = vmatpush.msra.mxu0 %v1888
          %1955 = vmatpush.msra.mxu0 %v1887
          %1956 = vmatpush.msra.mxu0 %v1886
          %1957 = vmatpush.msra.mxu0 %v1885
          %1958 = vmatpush.msra.mxu0 %v1884
          %1959 = vmatpush.msra.mxu0 %v1883
          %1960 = vmatmul.f32.gmra.mxu0 %v1831
          %v1961 = vpop.f32.mrf.mxu0
          %v1962 = vadd.f32 %v1933, %v1961
          %1963 = vmatmul.f32.gmra.mxu0 %v1834
          %v1964 = vpop.f32.mrf.mxu0
          %v1965 = vadd.f32 %v1936, %v1964
          %1966 = vmatmul.f32.gmra.mxu0 %v1837
          %v1967 = vpop.f32.mrf.mxu0
          %v1968 = vadd.f32 %v1939, %v1967
          %1969 = vmatmul.f32.gmra.mxu0 %v1840
          %v1970 = vpop.f32.mrf.mxu0
          %v1971 = vadd.f32 %v1942, %v1970
          %1972 = vdwg.mxu0
          %1973 = vst [vmem:[#allocation23] sm:$0xff] %v1962
          %1974 = vst [vmem:[#allocation23 + $0x8] sm:$0xff] %v1965
          %1975 = vst [vmem:[#allocation23 + $0x10] sm:$0xff] %v1968
          %1976 = vst [vmem:[#allocation23 + $0x18] sm:$0xff] %v1971
        $region148: #{tpu_custom_call.1} parent=91 // pred_fallthru
          _
        // Predicated region
        $region149: #{tpu_custom_call.1} parent=91 // pred_check
          %p1977 = pneg %p446
        $region150: #{tpu_custom_call.1} parent=91 // pred_check_branch
          %1979 = sbr.rel (%p1977) target = $region152
        $region151: #{tpu_custom_call.1} parent=91 // pred_region
          %1981 = vsyncadd [#allocation5], 0
          %s1982 = sshll.u32 [#allocation23], 4
          %s1983 = int_to_ptr.vmem [resolvable:$true] %s1982
          %s1984 = sshll.u32 %s18, 4
          %s1985 = int_to_ptr.hbm [resolvable:$true] %s1984
          %1990 = dma.vmem_to_hbm [thread:$0]  %s1983, 512, %s1985, [#allocation5], 128, 128, 8
        $region152: #{tpu_custom_call.1} parent=91 // pred_fallthru
          _
        // Predicated region
        $region153: #{tpu_custom_call.1} parent=91 // pred_check
          %p1991 = pneg %p467
        $region154: #{tpu_custom_call.1} parent=91 // pred_check_branch
          %1993 = sbr.rel (%p1991) target = $region156
        $region155: #{tpu_custom_call.1} parent=91 // pred_region
          %1995 = vsyncadd [#allocation25], 0
          %s1996 = sshll.u32 [#allocation24], 4
          %s1997 = int_to_ptr.vmem [resolvable:$true] %s1996
          %s1998 = sshll.u32 %s19, 4
          %s1999 = int_to_ptr.hbm [resolvable:$true] %s1998
          %2004 = dma.vmem_to_hbm [thread:$0]  %s1997, 2048, %s1999, [#allocation25], 128, 128, 8
        $region156: #{tpu_custom_call.1} parent=91 // pred_fallthru
          _
        // Predicated region
        $region157: #{tpu_custom_call.1} parent=91 // pred_check
          %p2005 = pneg %p488
        $region158: #{tpu_custom_call.1} parent=91 // pred_check_branch
          %2007 = sbr.rel (%p2005) target = $region160
        $region159: #{tpu_custom_call.1} parent=91 // pred_region
          %2009 = vsyncadd [#allocation25], 0
          %s2010 = sshll.u32 [#allocation26], 4
          %s2011 = int_to_ptr.vmem [resolvable:$true] %s2010
          %s2012 = sshll.u32 %s20, 4
          %s2013 = int_to_ptr.hbm [resolvable:$true] %s2012
          %2018 = dma.vmem_to_hbm [thread:$0]  %s2011, 2048, %s2013, [#allocation25], 128, 128, 8
        $region160: #{tpu_custom_call.1} parent=91 // pred_fallthru
          _
        // Predicated region
        $region161: #{tpu_custom_call.1} parent=91 // pred_check
          %p2019 = pneg %p446
        $region162: #{tpu_custom_call.1} parent=91 // pred_check_branch
          %2021 = sbr.rel (%p2019) target = $region164
        $region163: #{tpu_custom_call.1} parent=91 // pred_region
          %2023 = dma.done [#allocation5], 512
        $region164: #{tpu_custom_call.1} parent=91 // pred_fallthru
          _
        // Predicated region
        $region165: #{tpu_custom_call.1} parent=91 // pred_check
          %p2024 = pneg %p467
        $region166: #{tpu_custom_call.1} parent=91 // pred_check_branch
          %2026 = sbr.rel (%p2024) target = $region168
        $region167: #{tpu_custom_call.1} parent=91 // pred_region
          %2028 = dma.done [#allocation25], 2048
        $region168: #{tpu_custom_call.1} parent=91 // pred_fallthru
          _
        // Predicated region
        $region169: #{tpu_custom_call.1} parent=91 // pred_check
          %p2029 = pneg %p488
        $region170: #{tpu_custom_call.1} parent=91 // pred_check_branch
          %2031 = sbr.rel (%p2029) target = $region172
        $region171: #{tpu_custom_call.1} parent=91 // pred_region
          %2033 = dma.done [#allocation25], 2048
        $region172: #{tpu_custom_call.1} parent=91 // pred_fallthru
          _
      $region92: #{tpu_custom_call.1} parent=5 // pred_fallthru
        _
      %p2034 = scmp.le.s32.totalorder 2, %s40
      // Predicated region
      $region173: #{tpu_custom_call.1} parent=5 // pred_check
        %p2035 = pneg %p2034
      $region174: #{tpu_custom_call.1} parent=5 // pred_check_branch
        %2037 = sbr.rel (%p2035) target = $region176
      $region175: #{tpu_custom_call.1} parent=5 // pred_region
        %s2038 = ssub.s32 %s40, 2
      $region176: #{tpu_custom_call.1} parent=5 // pred_fallthru
        _
    $region6: #{tpu_custom_call.1} parent=1 // loop_footer
      %s44 = sadd.s32 1, %s40
    $region7: #{tpu_custom_call.1} parent=1 // loop_footer_branch
      %39 = sbr.rel target = $region3
    $region8: #{tpu_custom_call.1} parent=1 // loop_exit
      _
    %2039 = vsyncpa [#allocation4], 1
    %s2040 = scalar_lea.sflag [#allocation4], 1
    %2041 = vsyncpa %s2040, 1
    %2042 = vsyncpa [#allocation7], 1
    %s2043 = scalar_lea.sflag [#allocation7], 1
    %2044 = vsyncpa %s2043, 1
    %2045 = vsyncpa [#allocation10], 1
    %2046 = vsyncpa [#allocation13], 1
    %2047 = vsyncpa [#allocation16], 1
    %2048 = vsyncpa [#allocation19], 1
    %2049 = vsyncpa [#allocation22], 1
    %2050 = vsyncpa [#allocation5], 1
    %s2051 = scalar_lea.sflag [#allocation5], 1
    %2052 = vsyncpa %s2051, 1
    %2053 = vsyncpa [#allocation25], 1

</llo_original>
